<compile_context>
chip_gen: v5e
topology: v5e:2x2
jax: 0.10.0
libtpu: 0.0.40
codegen_flags: <defaults>
</compile_context>

<pallas_src>
import jax
import jax.numpy as jnp
from jax import lax
from jax.experimental import pallas as pl
from jax.experimental.pallas import tpu as pltpu

EPS = 1e-5

# Problem sizes implied by the PyTorch module: Conv2d(3, 3, 3) on (2, 3, 16, 16).
N, C, H, W = 2, 3, 16, 16
CO, CI, KH, KW = 3, 3, 3, 3
OH, OW = H - KH + 1, W - KW + 1          # 14, 14

BLK = N * W                              # 32 lanes encode (n, w)
REP = 4                                  # 4 blocks -> exactly one 128-lane tile
LANES = REP * BLK                        # 128
HP = H + KH - 1                          # 18 input rows (2 zero pad rows)
OHP = 16                                 # output rows padded to 2 sublane tiles
NTAPS = CI * KH * KW                     # 27
P_ROWS = 32                              # taps 0..26 | bias 27 | wsum 28 | pad
N_BN1 = REP * N * C * H * W              # elements in the replicated BN1 slab
N_BN2 = N * CO * OH * OW                 # valid elements entering BN2 stats


def model_kernel(x_ref, p_ref, o_ref):
    """BN -> Conv2d(3,3,3) -> BN on a lane-dense 128-lane slab.

    x_ref: (KW, C, HP, 128) f32.  Copy kw holds, at lane l = block*32+n*16+j,
           the value x[n, c, h, j+kw] (wrap / zero only in lanes that feed
           masked outputs), identically replicated over the 4 blocks;
           rows H..HP-1 are zero padding.
    p_ref: (32, 128) f32.  Row k<27 holds conv weight w[co,ci,kh,kw]
           (k = (ci*3+kh)*3+kw) broadcast over output-channel block co's 32
           lanes; row 27 = conv bias, row 28 = per-co weight sum; block 3 and
           rows 29..31 are zero.
    o_ref: (16, 128) f32 lane-dense output slab (rows >= 14 / pad lanes junk).
    """
    x0 = x_ref[0]                        # unshifted copy, (C, HP, 128)
    w_all = p_ref[...]                   # (32, 128)

    # ---- BN #1 statistics (single pass: sum + sum of squares).  Zero pad
    # rows contribute nothing and the lane replication is exactly REP whole
    # copies, so divide by REP*(N*C*H*W).  No consumer until the post-conv
    # affine below -> these reductions overlap the conv FMA chain.
    # NOTE: E[x^2]-m^2 can cancel for strongly shifted activations; fine for
    # the N(0,1) inputs this module sees.
    inv_n1 = 1.0 / N_BN1
    m1 = jnp.sum(x0) * inv_n1
    var1 = jnp.sum(x0 * x0) * inv_n1 - m1 * m1
    # rsqrt on a (1,128) vector (EUP slot); no scalar transcendentals.
    r1 = lax.rsqrt(jnp.full((1, LANES), var1 + EPS, dtype=jnp.float32))

    # ---- 3x3 valid conv on the RAW input; BN #1 folded into the epilogue:
    # conv(bn1(x)) = r1*conv(x) + (b - r1*m1*sum_w).  All CO channels at once
    # via lane-packed weights; the kw shift comes pre-applied from the wrapper
    # so every tap is a sublane slice + one full-lane FMA.
    acc = jnp.zeros((OHP, LANES), jnp.float32)
    for ci in range(CI):
        for kw in range(KW):
            plane = x0[ci] if kw == 0 else x_ref[kw, ci]     # (HP, 128)
            for kh in range(KH):
                k = (ci * KH + kh) * KW + kw
                wk = w_all[k:k + 1, :]                       # (1, 128)
                acc = acc + wk * plane[kh:kh + OHP, :]       # (16, 128) FMA
    b_row = w_all[NTAPS:NTAPS + 1, :]                        # conv bias row
    ws_row = w_all[NTAPS + 1:NTAPS + 2, :]                   # per-co sum of w
    v2 = acc * r1 + (b_row - (m1 * r1) * ws_row)             # folded BN1 affine

    # ---- BN #2 over the valid (n, co, oh, ow) elements only.
    row = lax.broadcasted_iota(jnp.int32, (OHP, LANES), 0)
    lane = lax.broadcasted_iota(jnp.int32, (OHP, LANES), 1)
    # (lane & (W-1)) assumes W is a power of two (true here: W = 16).
    valid = (row < OH) & (lane < CO * BLK) & ((lane & (W - 1)) < OW)
    v2m = jnp.where(valid, v2, 0.0)
    inv_n2 = 1.0 / N_BN2
    m2 = jnp.sum(v2m) * inv_n2
    var2 = jnp.sum(v2m * v2m) * inv_n2 - m2 * m2
    r2 = lax.rsqrt(jnp.full((1, LANES), var2 + EPS, dtype=jnp.float32))
    o_ref[...] = (v2 - m2) * r2          # two unmasked (8,128) vst tiles


def pack_params(w, b):
    """Lane-pack conv weight / bias / per-channel weight-sum into (32, 128).

    Call ONCE per parameter set and reuse the result (the per-call wrapper
    then only packs x and issues a single pallas_call).
    """
    w_flat = w.reshape(CO, NTAPS).astype(jnp.float32)                    # (3,27)
    tbl = jnp.concatenate(
        [w_flat, b.astype(jnp.float32)[:, None],
         jnp.sum(w_flat, axis=1, keepdims=True)], axis=1)                # (3,29)
    tbl = jnp.pad(tbl, ((0, 1), (0, P_ROWS - tbl.shape[1])))             # (4,32)
    return jnp.repeat(tbl, BLK, axis=0).T                                # (32,128)


@jax.jit
def run_model(x, p_packed):
    # ---- layout plumbing (outside the kernel, fused into this jit) ----
    # For each kw, lane l = block*32 + n*16 + j of copy kw must hold
    # x[n, c, h, j+kw]; the circular wrap (j >= 14) only feeds masked lanes.
    xs = jnp.stack([jnp.roll(x, -k, axis=-1) for k in range(KW)], axis=0)  # (KW,N,C,H,W)
    rows = jnp.transpose(xs, (0, 2, 3, 1, 4)).reshape(KW, C, H, N * W)     # (KW,C,H,32)
    rows = jnp.pad(rows, ((0, 0), (0, 0), (0, HP - H), (0, 0)))            # (KW,C,HP,32)
    x_packed = jnp.tile(rows, (1, 1, 1, REP)).astype(jnp.float32)          # (KW,C,HP,128)

    slab = pl.pallas_call(
        model_kernel,
        out_shape=jax.ShapeDtypeStruct((OHP, LANES), jnp.float32),
        in_specs=[
            pl.BlockSpec(memory_space=pltpu.MemorySpace.VMEM),   # packed x
            pl.BlockSpec(memory_space=pltpu.MemorySpace.VMEM),   # packed params
        ],
        out_specs=pl.BlockSpec(memory_space=pltpu.MemorySpace.VMEM),
    )(x_packed, p_packed)

    # Un-pack the lane-dense slab: out[n, co, i, j] = slab[i, co*32 + n*16 + j].
    out = slab[:OH, :CO * BLK].reshape(OH, CO, N, W)[:, :, :, :OW]
    return jnp.transpose(out, (2, 1, 0, 3))


def ref_model(x, w, b):
    """Pure-JAX reference (straightforward BN -> conv -> BN)."""
    def bn(t):
        m = jnp.mean(t)
        v = jnp.mean((t - m) ** 2)          # biased variance (train-mode norm)
        return (t - m) * lax.rsqrt(v + EPS)
    v1 = bn(x)
    v2 = lax.conv_general_dilated(
        v1, w, window_strides=(1, 1), padding="VALID",
        dimension_numbers=("NCHW", "OIHW", "NCHW"),
        precision=lax.Precision.HIGHEST,
    ) + b.reshape(1, -1, 1, 1)
    return bn(v2)


if __name__ == "__main__":
    key = jax.random.PRNGKey(0)
    kx, kw_, kb = jax.random.split(key, 3)

    x = jax.random.normal(kx, (N, C, H, W), dtype=jnp.float32)

    # Deterministic Conv2d-style init: U(-1/sqrt(fan_in), 1/sqrt(fan_in)).
    fan_in = CI * KH * KW
    bound = 1.0 / (fan_in ** 0.5)
    w = jax.random.uniform(kw_, (CO, CI, KH, KW), jnp.float32, -bound, bound)
    b = jax.random.uniform(kb, (CO,), jnp.float32, -bound, bound)

    p_packed = pack_params(w, b)          # packed once, reused every call
    out = run_model(x, p_packed)
    jax.block_until_ready(out)

    ref = ref_model(x, w, b)
    assert out.shape == (N, CO, OH, OW)
    assert jnp.allclose(out, ref, rtol=2e-4, atol=2e-4), "mismatch vs reference"

    print("KERNEL_OK")
</pallas_src>

<mosaic_0001>
module attributes {stable_mosaic.version = 11 : i64} {
  func.func @model_kernel(%arg0: memref<3x3x18x128xf32, #tpu.memory_space<vmem>>, %arg1: memref<32x128xf32, #tpu.memory_space<vmem>>, %arg2: memref<16x128xf32, #tpu.memory_space<vmem>>) attributes {dimension_semantics = [], scalar_prefetch = 0 : i64, scratch_operands = 0 : i64, tpu.core_type = #tpu.core_type<tc>} {
    %c0 = arith.constant 0 : index
    %c0_0 = arith.constant 0 : index
    %c0_1 = arith.constant 0 : index
    %c0_2 = arith.constant 0 : index
    %0 = vector.load %arg0[%c0, %c0_0, %c0_1, %c0_2] : memref<3x3x18x128xf32, #tpu.memory_space<vmem>>, vector<1x3x18x128xf32>
    %1 = vector.shape_cast %0 : vector<1x3x18x128xf32> to vector<3x18x128xf32>
    %c0_3 = arith.constant 0 : index
    %c0_4 = arith.constant 0 : index
    %2 = vector.load %arg1[%c0_3, %c0_4] : memref<32x128xf32, #tpu.memory_space<vmem>>, vector<32x128xf32>
    %3 = vector.shape_cast %1 : vector<3x18x128xf32> to vector<1x3x18x128xf32>
    %cst = arith.constant dense<0.000000e+00> : vector<1xf32>
    %4 = vector.multi_reduction <add>, %3, %cst [1, 2, 3] : vector<1x3x18x128xf32> to vector<1xf32>
    %5 = vector.shape_cast %4 : vector<1xf32> to vector<1x1x1x1xf32>
    %6 = vector.extract %5[0, 0, 0, 0] : f32 from vector<1x1x1x1xf32>
    %cst_5 = arith.constant 1.62760422E-4 : f32
    %7 = arith.mulf %6, %cst_5 : f32
    %8 = arith.mulf %1, %1 : vector<3x18x128xf32>
    %9 = vector.shape_cast %8 : vector<3x18x128xf32> to vector<1x3x18x128xf32>
    %cst_6 = arith.constant dense<0.000000e+00> : vector<1xf32>
    %10 = vector.multi_reduction <add>, %9, %cst_6 [1, 2, 3] : vector<1x3x18x128xf32> to vector<1xf32>
    %11 = vector.shape_cast %10 : vector<1xf32> to vector<1x1x1x1xf32>
    %12 = vector.extract %11[0, 0, 0, 0] : f32 from vector<1x1x1x1xf32>
    %cst_7 = arith.constant 1.62760422E-4 : f32
    %13 = arith.mulf %12, %cst_7 : f32
    %14 = arith.mulf %7, %7 : f32
    %15 = arith.subf %13, %14 : f32
    %cst_8 = arith.constant 9.99999974E-6 : f32
    %16 = arith.addf %15, %cst_8 : f32
    %17 = vector.broadcast %16 : f32 to vector<1x128xf32>
    %18 = math.rsqrt %17 : vector<1x128xf32>
    %cst_9 = arith.constant 0.000000e+00 : f32
    %19 = vector.broadcast %cst_9 : f32 to vector<16x128xf32>
    %20 = vector.extract_strided_slice %1 {offsets = [0, 0, 0], sizes = [1, 18, 128], strides = [1, 1, 1]} : vector<3x18x128xf32> to vector<1x18x128xf32>
    %21 = vector.shape_cast %20 : vector<1x18x128xf32> to vector<18x128xf32>
    %22 = vector.extract_strided_slice %2 {offsets = [0, 0], sizes = [1, 128], strides = [1, 1]} : vector<32x128xf32> to vector<1x128xf32>
    %23 = vector.extract_strided_slice %21 {offsets = [0, 0], sizes = [16, 128], strides = [1, 1]} : vector<18x128xf32> to vector<16x128xf32>
    %24 = vector.broadcast %22 : vector<1x128xf32> to vector<16x128xf32>
    %25 = arith.mulf %24, %23 : vector<16x128xf32>
    %26 = arith.addf %19, %25 : vector<16x128xf32>
    %27 = vector.extract_strided_slice %2 {offsets = [3, 0], sizes = [1, 128], strides = [1, 1]} : vector<32x128xf32> to vector<1x128xf32>
    %28 = vector.extract_strided_slice %21 {offsets = [1, 0], sizes = [16, 128], strides = [1, 1]} : vector<18x128xf32> to vector<16x128xf32>
    %29 = vector.broadcast %27 : vector<1x128xf32> to vector<16x128xf32>
    %30 = arith.mulf %29, %28 : vector<16x128xf32>
    %31 = arith.addf %26, %30 : vector<16x128xf32>
    %32 = vector.extract_strided_slice %2 {offsets = [6, 0], sizes = [1, 128], strides = [1, 1]} : vector<32x128xf32> to vector<1x128xf32>
    %33 = vector.extract_strided_slice %21 {offsets = [2, 0], sizes = [16, 128], strides = [1, 1]} : vector<18x128xf32> to vector<16x128xf32>
    %34 = vector.broadcast %32 : vector<1x128xf32> to vector<16x128xf32>
    %35 = arith.mulf %34, %33 : vector<16x128xf32>
    %36 = arith.addf %31, %35 : vector<16x128xf32>
    %c1 = arith.constant 1 : index
    %c0_10 = arith.constant 0 : index
    %c0_11 = arith.constant 0 : index
    %c0_12 = arith.constant 0 : index
    %37 = vector.load %arg0[%c1, %c0_10, %c0_11, %c0_12] : memref<3x3x18x128xf32, #tpu.memory_space<vmem>>, vector<1x1x18x128xf32>
    %38 = vector.shape_cast %37 : vector<1x1x18x128xf32> to vector<18x128xf32>
    %39 = vector.extract_strided_slice %2 {offsets = [1, 0], sizes = [1, 128], strides = [1, 1]} : vector<32x128xf32> to vector<1x128xf32>
    %40 = vector.extract_strided_slice %38 {offsets = [0, 0], sizes = [16, 128], strides = [1, 1]} : vector<18x128xf32> to vector<16x128xf32>
    %41 = vector.broadcast %39 : vector<1x128xf32> to vector<16x128xf32>
    %42 = arith.mulf %41, %40 : vector<16x128xf32>
    %43 = arith.addf %36, %42 : vector<16x128xf32>
    %44 = vector.extract_strided_slice %2 {offsets = [4, 0], sizes = [1, 128], strides = [1, 1]} : vector<32x128xf32> to vector<1x128xf32>
    %45 = vector.extract_strided_slice %38 {offsets = [1, 0], sizes = [16, 128], strides = [1, 1]} : vector<18x128xf32> to vector<16x128xf32>
    %46 = vector.broadcast %44 : vector<1x128xf32> to vector<16x128xf32>
    %47 = arith.mulf %46, %45 : vector<16x128xf32>
    %48 = arith.addf %43, %47 : vector<16x128xf32>
    %49 = vector.extract_strided_slice %2 {offsets = [7, 0], sizes = [1, 128], strides = [1, 1]} : vector<32x128xf32> to vector<1x128xf32>
    %50 = vector.extract_strided_slice %38 {offsets = [2, 0], sizes = [16, 128], strides = [1, 1]} : vector<18x128xf32> to vector<16x128xf32>
    %51 = vector.broadcast %49 : vector<1x128xf32> to vector<16x128xf32>
    %52 = arith.mulf %51, %50 : vector<16x128xf32>
    %53 = arith.addf %48, %52 : vector<16x128xf32>
    %c2 = arith.constant 2 : index
    %c0_13 = arith.constant 0 : index
    %c0_14 = arith.constant 0 : index
    %c0_15 = arith.constant 0 : index
    %54 = vector.load %arg0[%c2, %c0_13, %c0_14, %c0_15] : memref<3x3x18x128xf32, #tpu.memory_space<vmem>>, vector<1x1x18x128xf32>
    %55 = vector.shape_cast %54 : vector<1x1x18x128xf32> to vector<18x128xf32>
    %56 = vector.extract_strided_slice %2 {offsets = [2, 0], sizes = [1, 128], strides = [1, 1]} : vector<32x128xf32> to vector<1x128xf32>
    %57 = vector.extract_strided_slice %55 {offsets = [0, 0], sizes = [16, 128], strides = [1, 1]} : vector<18x128xf32> to vector<16x128xf32>
    %58 = vector.broadcast %56 : vector<1x128xf32> to vector<16x128xf32>
    %59 = arith.mulf %58, %57 : vector<16x128xf32>
    %60 = arith.addf %53, %59 : vector<16x128xf32>
    %61 = vector.extract_strided_slice %2 {offsets = [5, 0], sizes = [1, 128], strides = [1, 1]} : vector<32x128xf32> to vector<1x128xf32>
    %62 = vector.extract_strided_slice %55 {offsets = [1, 0], sizes = [16, 128], strides = [1, 1]} : vector<18x128xf32> to vector<16x128xf32>
    %63 = vector.broadcast %61 : vector<1x128xf32> to vector<16x128xf32>
    %64 = arith.mulf %63, %62 : vector<16x128xf32>
    %65 = arith.addf %60, %64 : vector<16x128xf32>
    %66 = vector.extract_strided_slice %2 {offsets = [8, 0], sizes = [1, 128], strides = [1, 1]} : vector<32x128xf32> to vector<1x128xf32>
    %67 = vector.extract_strided_slice %55 {offsets = [2, 0], sizes = [16, 128], strides = [1, 1]} : vector<18x128xf32> to vector<16x128xf32>
    %68 = vector.broadcast %66 : vector<1x128xf32> to vector<16x128xf32>
    %69 = arith.mulf %68, %67 : vector<16x128xf32>
    %70 = arith.addf %65, %69 : vector<16x128xf32>
    %71 = vector.extract_strided_slice %1 {offsets = [1, 0, 0], sizes = [1, 18, 128], strides = [1, 1, 1]} : vector<3x18x128xf32> to vector<1x18x128xf32>
    %72 = vector.shape_cast %71 : vector<1x18x128xf32> to vector<18x128xf32>
    %73 = vector.extract_strided_slice %2 {offsets = [9, 0], sizes = [1, 128], strides = [1, 1]} : vector<32x128xf32> to vector<1x128xf32>
    %74 = vector.extract_strided_slice %72 {offsets = [0, 0], sizes = [16, 128], strides = [1, 1]} : vector<18x128xf32> to vector<16x128xf32>
    %75 = vector.broadcast %73 : vector<1x128xf32> to vector<16x128xf32>
    %76 = arith.mulf %75, %74 : vector<16x128xf32>
    %77 = arith.addf %70, %76 : vector<16x128xf32>
    %78 = vector.extract_strided_slice %2 {offsets = [12, 0], sizes = [1, 128], strides = [1, 1]} : vector<32x128xf32> to vector<1x128xf32>
    %79 = vector.extract_strided_slice %72 {offsets = [1, 0], sizes = [16, 128], strides = [1, 1]} : vector<18x128xf32> to vector<16x128xf32>
    %80 = vector.broadcast %78 : vector<1x128xf32> to vector<16x128xf32>
    %81 = arith.mulf %80, %79 : vector<16x128xf32>
    %82 = arith.addf %77, %81 : vector<16x128xf32>
    %83 = vector.extract_strided_slice %2 {offsets = [15, 0], sizes = [1, 128], strides = [1, 1]} : vector<32x128xf32> to vector<1x128xf32>
    %84 = vector.extract_strided_slice %72 {offsets = [2, 0], sizes = [16, 128], strides = [1, 1]} : vector<18x128xf32> to vector<16x128xf32>
    %85 = vector.broadcast %83 : vector<1x128xf32> to vector<16x128xf32>
    %86 = arith.mulf %85, %84 : vector<16x128xf32>
    %87 = arith.addf %82, %86 : vector<16x128xf32>
    %c1_16 = arith.constant 1 : index
    %c1_17 = arith.constant 1 : index
    %c0_18 = arith.constant 0 : index
    %c0_19 = arith.constant 0 : index
    %88 = vector.load %arg0[%c1_16, %c1_17, %c0_18, %c0_19] : memref<3x3x18x128xf32, #tpu.memory_space<vmem>>, vector<1x1x18x128xf32>
    %89 = vector.shape_cast %88 : vector<1x1x18x128xf32> to vector<18x128xf32>
    %90 = vector.extract_strided_slice %2 {offsets = [10, 0], sizes = [1, 128], strides = [1, 1]} : vector<32x128xf32> to vector<1x128xf32>
    %91 = vector.extract_strided_slice %89 {offsets = [0, 0], sizes = [16, 128], strides = [1, 1]} : vector<18x128xf32> to vector<16x128xf32>
    %92 = vector.broadcast %90 : vector<1x128xf32> to vector<16x128xf32>
    %93 = arith.mulf %92, %91 : vector<16x128xf32>
    %94 = arith.addf %87, %93 : vector<16x128xf32>
    %95 = vector.extract_strided_slice %2 {offsets = [13, 0], sizes = [1, 128], strides = [1, 1]} : vector<32x128xf32> to vector<1x128xf32>
    %96 = vector.extract_strided_slice %89 {offsets = [1, 0], sizes = [16, 128], strides = [1, 1]} : vector<18x128xf32> to vector<16x128xf32>
    %97 = vector.broadcast %95 : vector<1x128xf32> to vector<16x128xf32>
    %98 = arith.mulf %97, %96 : vector<16x128xf32>
    %99 = arith.addf %94, %98 : vector<16x128xf32>
    %100 = vector.extract_strided_slice %2 {offsets = [16, 0], sizes = [1, 128], strides = [1, 1]} : vector<32x128xf32> to vector<1x128xf32>
    %101 = vector.extract_strided_slice %89 {offsets = [2, 0], sizes = [16, 128], strides = [1, 1]} : vector<18x128xf32> to vector<16x128xf32>
    %102 = vector.broadcast %100 : vector<1x128xf32> to vector<16x128xf32>
    %103 = arith.mulf %102, %101 : vector<16x128xf32>
    %104 = arith.addf %99, %103 : vector<16x128xf32>
    %c2_20 = arith.constant 2 : index
    %c1_21 = arith.constant 1 : index
    %c0_22 = arith.constant 0 : index
    %c0_23 = arith.constant 0 : index
    %105 = vector.load %arg0[%c2_20, %c1_21, %c0_22, %c0_23] : memref<3x3x18x128xf32, #tpu.memory_space<vmem>>, vector<1x1x18x128xf32>
    %106 = vector.shape_cast %105 : vector<1x1x18x128xf32> to vector<18x128xf32>
    %107 = vector.extract_strided_slice %2 {offsets = [11, 0], sizes = [1, 128], strides = [1, 1]} : vector<32x128xf32> to vector<1x128xf32>
    %108 = vector.extract_strided_slice %106 {offsets = [0, 0], sizes = [16, 128], strides = [1, 1]} : vector<18x128xf32> to vector<16x128xf32>
    %109 = vector.broadcast %107 : vector<1x128xf32> to vector<16x128xf32>
    %110 = arith.mulf %109, %108 : vector<16x128xf32>
    %111 = arith.addf %104, %110 : vector<16x128xf32>
    %112 = vector.extract_strided_slice %2 {offsets = [14, 0], sizes = [1, 128], strides = [1, 1]} : vector<32x128xf32> to vector<1x128xf32>
    %113 = vector.extract_strided_slice %106 {offsets = [1, 0], sizes = [16, 128], strides = [1, 1]} : vector<18x128xf32> to vector<16x128xf32>
    %114 = vector.broadcast %112 : vector<1x128xf32> to vector<16x128xf32>
    %115 = arith.mulf %114, %113 : vector<16x128xf32>
    %116 = arith.addf %111, %115 : vector<16x128xf32>
    %117 = vector.extract_strided_slice %2 {offsets = [17, 0], sizes = [1, 128], strides = [1, 1]} : vector<32x128xf32> to vector<1x128xf32>
    %118 = vector.extract_strided_slice %106 {offsets = [2, 0], sizes = [16, 128], strides = [1, 1]} : vector<18x128xf32> to vector<16x128xf32>
    %119 = vector.broadcast %117 : vector<1x128xf32> to vector<16x128xf32>
    %120 = arith.mulf %119, %118 : vector<16x128xf32>
    %121 = arith.addf %116, %120 : vector<16x128xf32>
    %122 = vector.extract_strided_slice %1 {offsets = [2, 0, 0], sizes = [1, 18, 128], strides = [1, 1, 1]} : vector<3x18x128xf32> to vector<1x18x128xf32>
    %123 = vector.shape_cast %122 : vector<1x18x128xf32> to vector<18x128xf32>
    %124 = vector.extract_strided_slice %2 {offsets = [18, 0], sizes = [1, 128], strides = [1, 1]} : vector<32x128xf32> to vector<1x128xf32>
    %125 = vector.extract_strided_slice %123 {offsets = [0, 0], sizes = [16, 128], strides = [1, 1]} : vector<18x128xf32> to vector<16x128xf32>
    %126 = vector.broadcast %124 : vector<1x128xf32> to vector<16x128xf32>
    %127 = arith.mulf %126, %125 : vector<16x128xf32>
    %128 = arith.addf %121, %127 : vector<16x128xf32>
    %129 = vector.extract_strided_slice %2 {offsets = [21, 0], sizes = [1, 128], strides = [1, 1]} : vector<32x128xf32> to vector<1x128xf32>
    %130 = vector.extract_strided_slice %123 {offsets = [1, 0], sizes = [16, 128], strides = [1, 1]} : vector<18x128xf32> to vector<16x128xf32>
    %131 = vector.broadcast %129 : vector<1x128xf32> to vector<16x128xf32>
    %132 = arith.mulf %131, %130 : vector<16x128xf32>
    %133 = arith.addf %128, %132 : vector<16x128xf32>
    %134 = vector.extract_strided_slice %2 {offsets = [24, 0], sizes = [1, 128], strides = [1, 1]} : vector<32x128xf32> to vector<1x128xf32>
    %135 = vector.extract_strided_slice %123 {offsets = [2, 0], sizes = [16, 128], strides = [1, 1]} : vector<18x128xf32> to vector<16x128xf32>
    %136 = vector.broadcast %134 : vector<1x128xf32> to vector<16x128xf32>
    %137 = arith.mulf %136, %135 : vector<16x128xf32>
    %138 = arith.addf %133, %137 : vector<16x128xf32>
    %c1_24 = arith.constant 1 : index
    %c2_25 = arith.constant 2 : index
    %c0_26 = arith.constant 0 : index
    %c0_27 = arith.constant 0 : index
    %139 = vector.load %arg0[%c1_24, %c2_25, %c0_26, %c0_27] : memref<3x3x18x128xf32, #tpu.memory_space<vmem>>, vector<1x1x18x128xf32>
    %140 = vector.shape_cast %139 : vector<1x1x18x128xf32> to vector<18x128xf32>
    %141 = vector.extract_strided_slice %2 {offsets = [19, 0], sizes = [1, 128], strides = [1, 1]} : vector<32x128xf32> to vector<1x128xf32>
    %142 = vector.extract_strided_slice %140 {offsets = [0, 0], sizes = [16, 128], strides = [1, 1]} : vector<18x128xf32> to vector<16x128xf32>
    %143 = vector.broadcast %141 : vector<1x128xf32> to vector<16x128xf32>
    %144 = arith.mulf %143, %142 : vector<16x128xf32>
    %145 = arith.addf %138, %144 : vector<16x128xf32>
    %146 = vector.extract_strided_slice %2 {offsets = [22, 0], sizes = [1, 128], strides = [1, 1]} : vector<32x128xf32> to vector<1x128xf32>
    %147 = vector.extract_strided_slice %140 {offsets = [1, 0], sizes = [16, 128], strides = [1, 1]} : vector<18x128xf32> to vector<16x128xf32>
    %148 = vector.broadcast %146 : vector<1x128xf32> to vector<16x128xf32>
    %149 = arith.mulf %148, %147 : vector<16x128xf32>
    %150 = arith.addf %145, %149 : vector<16x128xf32>
    %151 = vector.extract_strided_slice %2 {offsets = [25, 0], sizes = [1, 128], strides = [1, 1]} : vector<32x128xf32> to vector<1x128xf32>
    %152 = vector.extract_strided_slice %140 {offsets = [2, 0], sizes = [16, 128], strides = [1, 1]} : vector<18x128xf32> to vector<16x128xf32>
    %153 = vector.broadcast %151 : vector<1x128xf32> to vector<16x128xf32>
    %154 = arith.mulf %153, %152 : vector<16x128xf32>
    %155 = arith.addf %150, %154 : vector<16x128xf32>
    %c2_28 = arith.constant 2 : index
    %c2_29 = arith.constant 2 : index
    %c0_30 = arith.constant 0 : index
    %c0_31 = arith.constant 0 : index
    %156 = vector.load %arg0[%c2_28, %c2_29, %c0_30, %c0_31] : memref<3x3x18x128xf32, #tpu.memory_space<vmem>>, vector<1x1x18x128xf32>
    %157 = vector.shape_cast %156 : vector<1x1x18x128xf32> to vector<18x128xf32>
    %158 = vector.extract_strided_slice %2 {offsets = [20, 0], sizes = [1, 128], strides = [1, 1]} : vector<32x128xf32> to vector<1x128xf32>
    %159 = vector.extract_strided_slice %157 {offsets = [0, 0], sizes = [16, 128], strides = [1, 1]} : vector<18x128xf32> to vector<16x128xf32>
    %160 = vector.broadcast %158 : vector<1x128xf32> to vector<16x128xf32>
    %161 = arith.mulf %160, %159 : vector<16x128xf32>
    %162 = arith.addf %155, %161 : vector<16x128xf32>
    %163 = vector.extract_strided_slice %2 {offsets = [23, 0], sizes = [1, 128], strides = [1, 1]} : vector<32x128xf32> to vector<1x128xf32>
    %164 = vector.extract_strided_slice %157 {offsets = [1, 0], sizes = [16, 128], strides = [1, 1]} : vector<18x128xf32> to vector<16x128xf32>
    %165 = vector.broadcast %163 : vector<1x128xf32> to vector<16x128xf32>
    %166 = arith.mulf %165, %164 : vector<16x128xf32>
    %167 = arith.addf %162, %166 : vector<16x128xf32>
    %168 = vector.extract_strided_slice %2 {offsets = [26, 0], sizes = [1, 128], strides = [1, 1]} : vector<32x128xf32> to vector<1x128xf32>
    %169 = vector.extract_strided_slice %157 {offsets = [2, 0], sizes = [16, 128], strides = [1, 1]} : vector<18x128xf32> to vector<16x128xf32>
    %170 = vector.broadcast %168 : vector<1x128xf32> to vector<16x128xf32>
    %171 = arith.mulf %170, %169 : vector<16x128xf32>
    %172 = arith.addf %167, %171 : vector<16x128xf32>
    %173 = vector.extract_strided_slice %2 {offsets = [27, 0], sizes = [1, 128], strides = [1, 1]} : vector<32x128xf32> to vector<1x128xf32>
    %174 = vector.extract_strided_slice %2 {offsets = [28, 0], sizes = [1, 128], strides = [1, 1]} : vector<32x128xf32> to vector<1x128xf32>
    %175 = vector.broadcast %18 : vector<1x128xf32> to vector<16x128xf32>
    %176 = arith.mulf %172, %175 : vector<16x128xf32>
    %177 = vector.broadcast %7 : f32 to vector<1x128xf32>
    %178 = arith.mulf %177, %18 : vector<1x128xf32>
    %179 = arith.mulf %178, %174 : vector<1x128xf32>
    %180 = arith.subf %173, %179 : vector<1x128xf32>
    %181 = vector.broadcast %180 : vector<1x128xf32> to vector<16x128xf32>
    %182 = arith.addf %176, %181 : vector<16x128xf32>
    %183 = tpu.iota {dimensions = array<i32: 0>} : vector<16x128xi32>
    %184 = tpu.iota {dimensions = array<i32: 1>} : vector<16x128xi32>
    %c14_i32 = arith.constant 14 : i32
    %185 = vector.broadcast %c14_i32 : i32 to vector<16x128xi32>
    %186 = arith.cmpi slt, %183, %185 : vector<16x128xi32>
    %c96_i32 = arith.constant 96 : i32
    %187 = vector.broadcast %c96_i32 : i32 to vector<16x128xi32>
    %188 = arith.cmpi slt, %184, %187 : vector<16x128xi32>
    %189 = arith.andi %186, %188 : vector<16x128xi1>
    %c15_i32 = arith.constant 15 : i32
    %190 = vector.broadcast %c15_i32 : i32 to vector<16x128xi32>
    %191 = arith.andi %184, %190 : vector<16x128xi32>
    %c14_i32_32 = arith.constant 14 : i32
    %192 = vector.broadcast %c14_i32_32 : i32 to vector<16x128xi32>
    %193 = arith.cmpi slt, %191, %192 : vector<16x128xi32>
    %194 = arith.andi %189, %193 : vector<16x128xi1>
    %cst_33 = arith.constant 0.000000e+00 : f32
    %195 = vector.broadcast %cst_33 : f32 to vector<16x128xf32>
    %196 = arith.select %194, %182, %195 : vector<16x128xi1>, vector<16x128xf32>
    %197 = vector.shape_cast %196 : vector<16x128xf32> to vector<1x16x128xf32>
    %cst_34 = arith.constant dense<0.000000e+00> : vector<1xf32>
    %198 = vector.multi_reduction <add>, %197, %cst_34 [1, 2] : vector<1x16x128xf32> to vector<1xf32>
    %199 = vector.shape_cast %198 : vector<1xf32> to vector<1x1x1xf32>
    %200 = vector.extract %199[0, 0, 0] : f32 from vector<1x1x1xf32>
    %cst_35 = arith.constant 8.50340118E-4 : f32
    %201 = arith.mulf %200, %cst_35 : f32
    %202 = arith.mulf %196, %196 : vector<16x128xf32>
    %203 = vector.shape_cast %202 : vector<16x128xf32> to vector<1x16x128xf32>
    %cst_36 = arith.constant dense<0.000000e+00> : vector<1xf32>
    %204 = vector.multi_reduction <add>, %203, %cst_36 [1, 2] : vector<1x16x128xf32> to vector<1xf32>
    %205 = vector.shape_cast %204 : vector<1xf32> to vector<1x1x1xf32>
    %206 = vector.extract %205[0, 0, 0] : f32 from vector<1x1x1xf32>
    %cst_37 = arith.constant 8.50340118E-4 : f32
    %207 = arith.mulf %206, %cst_37 : f32
    %208 = arith.mulf %201, %201 : f32
    %209 = arith.subf %207, %208 : f32
    %cst_38 = arith.constant 9.99999974E-6 : f32
    %210 = arith.addf %209, %cst_38 : f32
    %211 = vector.broadcast %210 : f32 to vector<1x128xf32>
    %212 = math.rsqrt %211 : vector<1x128xf32>
    %213 = vector.broadcast %201 : f32 to vector<16x128xf32>
    %214 = arith.subf %182, %213 : vector<16x128xf32>
    %215 = vector.broadcast %212 : vector<1x128xf32> to vector<16x128xf32>
    %216 = arith.mulf %214, %215 : vector<16x128xf32>
    %c0_39 = arith.constant 0 : index
    %c0_40 = arith.constant 0 : index
    %217 = vector.load %arg2[%c0_39, %c0_40] : memref<16x128xf32, #tpu.memory_space<vmem>>, vector<16x128xf32>
    tpu.vector_store %arg2[%c0_39, %c0_40], %216 {strides = array<i32>} : memref<16x128xf32, #tpu.memory_space<vmem>>, vector<16x128xf32>,
    return
  }
}

</mosaic_0001>

<llo_original>
// kernel: tile.9
$region0: #{tile.9}
  %s0 = inlined_call_operand.vmem [shape: f32[3,3,18,4,32], index: 0, kind: input, shape index: {}]
  %s1 = inlined_call_operand.vmem [shape: f32[3,3,18,128], index: 1, kind: output, shape index: {}]
  $region1: #{tile.9} parent=0
    #allocation0 [shape = 'u8[663552]{0}', space=vmem, size = 0xa2000, scoped, tag = 'scoped mem for input reshape']
    %s3 = ssub.s32 16, 1
    %s4 = scalar_lea.vmem %s0, 644
    %v5 = vld [vmem:[%s4] sm:%s3]
    %s6 = scalar_lea.vmem [#allocation0], 1288
    %7 = vst [vmem:[%s6] sm:%s3] %v5
    %s8 = scalar_lea.vmem %s0, 640
    %v9 = vld [vmem:[%s8] sm:%s3]
    %s10 = scalar_lea.vmem [#allocation0], 1280
    %11 = vst [vmem:[%s10] sm:%s3] %v9
    %s12 = scalar_lea.vmem %s0, 636
    %v13 = vld [vmem:[%s12] sm:%s3]
    %s14 = scalar_lea.vmem [#allocation0], 1272
    %15 = vst [vmem:[%s14] sm:%s3] %v13
    %s16 = scalar_lea.vmem %s0, 632
    %v17 = vld [vmem:[%s16] sm:%s3]
    %s18 = scalar_lea.vmem [#allocation0], 1264
    %19 = vst [vmem:[%s18] sm:%s3] %v17
    %s20 = scalar_lea.vmem %s0, 628
    %v21 = vld [vmem:[%s20] sm:%s3]
    %s22 = scalar_lea.vmem [#allocation0], 1256
    %23 = vst [vmem:[%s22] sm:%s3] %v21
    %s24 = scalar_lea.vmem %s0, 624
    %v25 = vld [vmem:[%s24] sm:%s3]
    %s26 = scalar_lea.vmem [#allocation0], 1248
    %27 = vst [vmem:[%s26] sm:%s3] %v25
    %s28 = scalar_lea.vmem %s0, 620
    %v29 = vld [vmem:[%s28] sm:%s3]
    %s30 = scalar_lea.vmem [#allocation0], 1240
    %31 = vst [vmem:[%s30] sm:%s3] %v29
    %s32 = scalar_lea.vmem %s0, 616
    %v33 = vld [vmem:[%s32] sm:%s3]
    %s34 = scalar_lea.vmem [#allocation0], 1232
    %35 = vst [vmem:[%s34] sm:%s3] %v33
    %s36 = scalar_lea.vmem %s0, 612
    %v37 = vld [vmem:[%s36] sm:%s3]
    %s38 = scalar_lea.vmem [#allocation0], 1224
    %39 = vst [vmem:[%s38] sm:%s3] %v37
    %s40 = scalar_lea.vmem %s0, 608
    %v41 = vld [vmem:[%s40] sm:%s3]
    %s42 = scalar_lea.vmem [#allocation0], 1216
    %43 = vst [vmem:[%s42] sm:%s3] %v41
    %s44 = scalar_lea.vmem %s0, 604
    %v45 = vld [vmem:[%s44] sm:%s3]
    %s46 = scalar_lea.vmem [#allocation0], 1208
    %47 = vst [vmem:[%s46] sm:%s3] %v45
    %s48 = scalar_lea.vmem %s0, 600
    %v49 = vld [vmem:[%s48] sm:%s3]
    %s50 = scalar_lea.vmem [#allocation0], 1200
    %51 = vst [vmem:[%s50] sm:%s3] %v49
    %s52 = scalar_lea.vmem %s0, 596
    %v53 = vld [vmem:[%s52] sm:%s3]
    %s54 = scalar_lea.vmem [#allocation0], 1192
    %55 = vst [vmem:[%s54] sm:%s3] %v53
    %s56 = scalar_lea.vmem %s0, 592
    %v57 = vld [vmem:[%s56] sm:%s3]
    %s58 = scalar_lea.vmem [#allocation0], 1184
    %59 = vst [vmem:[%s58] sm:%s3] %v57
    %s60 = scalar_lea.vmem %s0, 588
    %v61 = vld [vmem:[%s60] sm:%s3]
    %s62 = scalar_lea.vmem [#allocation0], 1176
    %63 = vst [vmem:[%s62] sm:%s3] %v61
    %s64 = scalar_lea.vmem %s0, 584
    %v65 = vld [vmem:[%s64] sm:%s3]
    %s66 = scalar_lea.vmem [#allocation0], 1168
    %67 = vst [vmem:[%s66] sm:%s3] %v65
    %s68 = scalar_lea.vmem %s0, 580
    %v69 = vld [vmem:[%s68] sm:%s3]
    %s70 = scalar_lea.vmem [#allocation0], 1160
    %71 = vst [vmem:[%s70] sm:%s3] %v69
    %s72 = scalar_lea.vmem %s0, 576
    %v73 = vld [vmem:[%s72] sm:%s3]
    %s74 = scalar_lea.vmem [#allocation0], 1152
    %75 = vst [vmem:[%s74] sm:%s3] %v73
    %s76 = scalar_lea.vmem %s0, 572
    %v77 = vld [vmem:[%s76] sm:%s3]
    %s78 = scalar_lea.vmem [#allocation0], 1144
    %79 = vst [vmem:[%s78] sm:%s3] %v77
    %s80 = scalar_lea.vmem %s0, 568
    %v81 = vld [vmem:[%s80] sm:%s3]
    %s82 = scalar_lea.vmem [#allocation0], 1136
    %83 = vst [vmem:[%s82] sm:%s3] %v81
    %s84 = scalar_lea.vmem %s0, 564
    %v85 = vld [vmem:[%s84] sm:%s3]
    %s86 = scalar_lea.vmem [#allocation0], 1128
    %87 = vst [vmem:[%s86] sm:%s3] %v85
    %s88 = scalar_lea.vmem %s0, 560
    %v89 = vld [vmem:[%s88] sm:%s3]
    %s90 = scalar_lea.vmem [#allocation0], 1120
    %91 = vst [vmem:[%s90] sm:%s3] %v89
    %s92 = scalar_lea.vmem %s0, 556
    %v93 = vld [vmem:[%s92] sm:%s3]
    %s94 = scalar_lea.vmem [#allocation0], 1112
    %95 = vst [vmem:[%s94] sm:%s3] %v93
    %s96 = scalar_lea.vmem %s0, 552
    %v97 = vld [vmem:[%s96] sm:%s3]
    %s98 = scalar_lea.vmem [#allocation0], 1104
    %99 = vst [vmem:[%s98] sm:%s3] %v97
    %s100 = scalar_lea.vmem %s0, 548
    %v101 = vld [vmem:[%s100] sm:%s3]
    %s102 = scalar_lea.vmem [#allocation0], 1096
    %103 = vst [vmem:[%s102] sm:%s3] %v101
    %s104 = scalar_lea.vmem %s0, 544
    %v105 = vld [vmem:[%s104] sm:%s3]
    %s106 = scalar_lea.vmem [#allocation0], 1088
    %107 = vst [vmem:[%s106] sm:%s3] %v105
    %s108 = scalar_lea.vmem %s0, 540
    %v109 = vld [vmem:[%s108] sm:%s3]
    %s110 = scalar_lea.vmem [#allocation0], 1080
    %111 = vst [vmem:[%s110] sm:%s3] %v109
    %s112 = scalar_lea.vmem %s0, 536
    %v113 = vld [vmem:[%s112] sm:%s3]
    %s114 = scalar_lea.vmem [#allocation0], 1072
    %115 = vst [vmem:[%s114] sm:%s3] %v113
    %s116 = scalar_lea.vmem %s0, 532
    %v117 = vld [vmem:[%s116] sm:%s3]
    %s118 = scalar_lea.vmem [#allocation0], 1064
    %119 = vst [vmem:[%s118] sm:%s3] %v117
    %s120 = scalar_lea.vmem %s0, 528
    %v121 = vld [vmem:[%s120] sm:%s3]
    %s122 = scalar_lea.vmem [#allocation0], 1056
    %123 = vst [vmem:[%s122] sm:%s3] %v121
    %s124 = scalar_lea.vmem %s0, 524
    %v125 = vld [vmem:[%s124] sm:%s3]
    %s126 = scalar_lea.vmem [#allocation0], 1048
    %127 = vst [vmem:[%s126] sm:%s3] %v125
    %s128 = scalar_lea.vmem %s0, 520
    %v129 = vld [vmem:[%s128] sm:%s3]
    %s130 = scalar_lea.vmem [#allocation0], 1040
    %131 = vst [vmem:[%s130] sm:%s3] %v129
    %s132 = scalar_lea.vmem %s0, 516
    %v133 = vld [vmem:[%s132] sm:%s3]
    %s134 = scalar_lea.vmem [#allocation0], 1032
    %135 = vst [vmem:[%s134] sm:%s3] %v133
    %s136 = scalar_lea.vmem %s0, 512
    %v137 = vld [vmem:[%s136] sm:%s3]
    %s138 = scalar_lea.vmem [#allocation0], 1024
    %139 = vst [vmem:[%s138] sm:%s3] %v137
    %s140 = scalar_lea.vmem %s0, 508
    %v141 = vld [vmem:[%s140] sm:%s3]
    %s142 = scalar_lea.vmem [#allocation0], 1016
    %143 = vst [vmem:[%s142] sm:%s3] %v141
    %s144 = scalar_lea.vmem %s0, 504
    %v145 = vld [vmem:[%s144] sm:%s3]
    %s146 = scalar_lea.vmem [#allocation0], 1008
    %147 = vst [vmem:[%s146] sm:%s3] %v145
    %s148 = scalar_lea.vmem %s0, 500
    %v149 = vld [vmem:[%s148] sm:%s3]
    %s150 = scalar_lea.vmem [#allocation0], 1000
    %151 = vst [vmem:[%s150] sm:%s3] %v149
    %s152 = scalar_lea.vmem %s0, 496
    %v153 = vld [vmem:[%s152] sm:%s3]
    %s154 = scalar_lea.vmem [#allocation0], 992
    %155 = vst [vmem:[%s154] sm:%s3] %v153
    %s156 = scalar_lea.vmem %s0, 492
    %v157 = vld [vmem:[%s156] sm:%s3]
    %s158 = scalar_lea.vmem [#allocation0], 984
    %159 = vst [vmem:[%s158] sm:%s3] %v157
    %s160 = scalar_lea.vmem %s0, 488
    %v161 = vld [vmem:[%s160] sm:%s3]
    %s162 = scalar_lea.vmem [#allocation0], 976
    %163 = vst [vmem:[%s162] sm:%s3] %v161
    %s164 = scalar_lea.vmem %s0, 484
    %v165 = vld [vmem:[%s164] sm:%s3]
    %s166 = scalar_lea.vmem [#allocation0], 968
    %167 = vst [vmem:[%s166] sm:%s3] %v165
    %s168 = scalar_lea.vmem %s0, 480
    %v169 = vld [vmem:[%s168] sm:%s3]
    %s170 = scalar_lea.vmem [#allocation0], 960
    %171 = vst [vmem:[%s170] sm:%s3] %v169
    %s172 = scalar_lea.vmem %s0, 476
    %v173 = vld [vmem:[%s172] sm:%s3]
    %s174 = scalar_lea.vmem [#allocation0], 952
    %175 = vst [vmem:[%s174] sm:%s3] %v173
    %s176 = scalar_lea.vmem %s0, 472
    %v177 = vld [vmem:[%s176] sm:%s3]
    %s178 = scalar_lea.vmem [#allocation0], 944
    %179 = vst [vmem:[%s178] sm:%s3] %v177
    %s180 = scalar_lea.vmem %s0, 468
    %v181 = vld [vmem:[%s180] sm:%s3]
    %s182 = scalar_lea.vmem [#allocation0], 936
    %183 = vst [vmem:[%s182] sm:%s3] %v181
    %s184 = scalar_lea.vmem %s0, 464
    %v185 = vld [vmem:[%s184] sm:%s3]
    %s186 = scalar_lea.vmem [#allocation0], 928
    %187 = vst [vmem:[%s186] sm:%s3] %v185
    %s188 = scalar_lea.vmem %s0, 460
    %v189 = vld [vmem:[%s188] sm:%s3]
    %s190 = scalar_lea.vmem [#allocation0], 920
    %191 = vst [vmem:[%s190] sm:%s3] %v189
    %s192 = scalar_lea.vmem %s0, 456
    %v193 = vld [vmem:[%s192] sm:%s3]
    %s194 = scalar_lea.vmem [#allocation0], 912
    %195 = vst [vmem:[%s194] sm:%s3] %v193
    %s196 = scalar_lea.vmem %s0, 452
    %v197 = vld [vmem:[%s196] sm:%s3]
    %s198 = scalar_lea.vmem [#allocation0], 904
    %199 = vst [vmem:[%s198] sm:%s3] %v197
    %s200 = scalar_lea.vmem %s0, 448
    %v201 = vld [vmem:[%s200] sm:%s3]
    %s202 = scalar_lea.vmem [#allocation0], 896
    %203 = vst [vmem:[%s202] sm:%s3] %v201
    %s204 = scalar_lea.vmem %s0, 444
    %v205 = vld [vmem:[%s204] sm:%s3]
    %s206 = scalar_lea.vmem [#allocation0], 888
    %207 = vst [vmem:[%s206] sm:%s3] %v205
    %s208 = scalar_lea.vmem %s0, 440
    %v209 = vld [vmem:[%s208] sm:%s3]
    %s210 = scalar_lea.vmem [#allocation0], 880
    %211 = vst [vmem:[%s210] sm:%s3] %v209
    %s212 = scalar_lea.vmem %s0, 436
    %v213 = vld [vmem:[%s212] sm:%s3]
    %s214 = scalar_lea.vmem [#allocation0], 872
    %215 = vst [vmem:[%s214] sm:%s3] %v213
    %s216 = scalar_lea.vmem %s0, 432
    %v217 = vld [vmem:[%s216] sm:%s3]
    %s218 = scalar_lea.vmem [#allocation0], 864
    %219 = vst [vmem:[%s218] sm:%s3] %v217
    %s220 = scalar_lea.vmem %s0, 428
    %v221 = vld [vmem:[%s220] sm:%s3]
    %s222 = scalar_lea.vmem [#allocation0], 856
    %223 = vst [vmem:[%s222] sm:%s3] %v221
    %s224 = scalar_lea.vmem %s0, 424
    %v225 = vld [vmem:[%s224] sm:%s3]
    %s226 = scalar_lea.vmem [#allocation0], 848
    %227 = vst [vmem:[%s226] sm:%s3] %v225
    %s228 = scalar_lea.vmem %s0, 420
    %v229 = vld [vmem:[%s228] sm:%s3]
    %s230 = scalar_lea.vmem [#allocation0], 840
    %231 = vst [vmem:[%s230] sm:%s3] %v229
    %s232 = scalar_lea.vmem %s0, 416
    %v233 = vld [vmem:[%s232] sm:%s3]
    %s234 = scalar_lea.vmem [#allocation0], 832
    %235 = vst [vmem:[%s234] sm:%s3] %v233
    %s236 = scalar_lea.vmem %s0, 412
    %v237 = vld [vmem:[%s236] sm:%s3]
    %s238 = scalar_lea.vmem [#allocation0], 824
    %239 = vst [vmem:[%s238] sm:%s3] %v237
    %s240 = scalar_lea.vmem %s0, 408
    %v241 = vld [vmem:[%s240] sm:%s3]
    %s242 = scalar_lea.vmem [#allocation0], 816
    %243 = vst [vmem:[%s242] sm:%s3] %v241
    %s244 = scalar_lea.vmem %s0, 404
    %v245 = vld [vmem:[%s244] sm:%s3]
    %s246 = scalar_lea.vmem [#allocation0], 808
    %247 = vst [vmem:[%s246] sm:%s3] %v245
    %s248 = scalar_lea.vmem %s0, 400
    %v249 = vld [vmem:[%s248] sm:%s3]
    %s250 = scalar_lea.vmem [#allocation0], 800
    %251 = vst [vmem:[%s250] sm:%s3] %v249
    %s252 = scalar_lea.vmem %s0, 396
    %v253 = vld [vmem:[%s252] sm:%s3]
    %s254 = scalar_lea.vmem [#allocation0], 792
    %255 = vst [vmem:[%s254] sm:%s3] %v253
    %s256 = scalar_lea.vmem %s0, 392
    %v257 = vld [vmem:[%s256] sm:%s3]
    %s258 = scalar_lea.vmem [#allocation0], 784
    %259 = vst [vmem:[%s258] sm:%s3] %v257
    %s260 = scalar_lea.vmem %s0, 388
    %v261 = vld [vmem:[%s260] sm:%s3]
    %s262 = scalar_lea.vmem [#allocation0], 776
    %263 = vst [vmem:[%s262] sm:%s3] %v261
    %s264 = scalar_lea.vmem %s0, 384
    %v265 = vld [vmem:[%s264] sm:%s3]
    %s266 = scalar_lea.vmem [#allocation0], 768
    %267 = vst [vmem:[%s266] sm:%s3] %v265
    %s268 = scalar_lea.vmem %s0, 380
    %v269 = vld [vmem:[%s268] sm:%s3]
    %s270 = scalar_lea.vmem [#allocation0], 760
    %271 = vst [vmem:[%s270] sm:%s3] %v269
    %s272 = scalar_lea.vmem %s0, 376
    %v273 = vld [vmem:[%s272] sm:%s3]
    %s274 = scalar_lea.vmem [#allocation0], 752
    %275 = vst [vmem:[%s274] sm:%s3] %v273
    %s276 = scalar_lea.vmem %s0, 372
    %v277 = vld [vmem:[%s276] sm:%s3]
    %s278 = scalar_lea.vmem [#allocation0], 744
    %279 = vst [vmem:[%s278] sm:%s3] %v277
    %s280 = scalar_lea.vmem %s0, 368
    %v281 = vld [vmem:[%s280] sm:%s3]
    %s282 = scalar_lea.vmem [#allocation0], 736
    %283 = vst [vmem:[%s282] sm:%s3] %v281
    %s284 = scalar_lea.vmem %s0, 364
    %v285 = vld [vmem:[%s284] sm:%s3]
    %s286 = scalar_lea.vmem [#allocation0], 728
    %287 = vst [vmem:[%s286] sm:%s3] %v285
    %s288 = scalar_lea.vmem %s0, 360
    %v289 = vld [vmem:[%s288] sm:%s3]
    %s290 = scalar_lea.vmem [#allocation0], 720
    %291 = vst [vmem:[%s290] sm:%s3] %v289
    %s292 = scalar_lea.vmem %s0, 356
    %v293 = vld [vmem:[%s292] sm:%s3]
    %s294 = scalar_lea.vmem [#allocation0], 712
    %295 = vst [vmem:[%s294] sm:%s3] %v293
    %s296 = scalar_lea.vmem %s0, 352
    %v297 = vld [vmem:[%s296] sm:%s3]
    %s298 = scalar_lea.vmem [#allocation0], 704
    %299 = vst [vmem:[%s298] sm:%s3] %v297
    %s300 = scalar_lea.vmem %s0, 348
    %v301 = vld [vmem:[%s300] sm:%s3]
    %s302 = scalar_lea.vmem [#allocation0], 696
    %303 = vst [vmem:[%s302] sm:%s3] %v301
    %s304 = scalar_lea.vmem %s0, 344
    %v305 = vld [vmem:[%s304] sm:%s3]
    %s306 = scalar_lea.vmem [#allocation0], 688
    %307 = vst [vmem:[%s306] sm:%s3] %v305
    %s308 = scalar_lea.vmem %s0, 340
    %v309 = vld [vmem:[%s308] sm:%s3]
    %s310 = scalar_lea.vmem [#allocation0], 680
    %311 = vst [vmem:[%s310] sm:%s3] %v309
    %s312 = scalar_lea.vmem %s0, 336
    %v313 = vld [vmem:[%s312] sm:%s3]
    %s314 = scalar_lea.vmem [#allocation0], 672
    %315 = vst [vmem:[%s314] sm:%s3] %v313
    %s316 = scalar_lea.vmem %s0, 332
    %v317 = vld [vmem:[%s316] sm:%s3]
    %s318 = scalar_lea.vmem [#allocation0], 664
    %319 = vst [vmem:[%s318] sm:%s3] %v317
    %s320 = scalar_lea.vmem %s0, 328
    %v321 = vld [vmem:[%s320] sm:%s3]
    %s322 = scalar_lea.vmem [#allocation0], 656
    %323 = vst [vmem:[%s322] sm:%s3] %v321
    %s324 = scalar_lea.vmem %s0, 324
    %v325 = vld [vmem:[%s324] sm:%s3]
    %s326 = scalar_lea.vmem [#allocation0], 648
    %327 = vst [vmem:[%s326] sm:%s3] %v325
    %s328 = scalar_lea.vmem %s0, 320
    %v329 = vld [vmem:[%s328] sm:%s3]
    %s330 = scalar_lea.vmem [#allocation0], 640
    %331 = vst [vmem:[%s330] sm:%s3] %v329
    %s332 = scalar_lea.vmem %s0, 316
    %v333 = vld [vmem:[%s332] sm:%s3]
    %s334 = scalar_lea.vmem [#allocation0], 632
    %335 = vst [vmem:[%s334] sm:%s3] %v333
    %s336 = scalar_lea.vmem %s0, 312
    %v337 = vld [vmem:[%s336] sm:%s3]
    %s338 = scalar_lea.vmem [#allocation0], 624
    %339 = vst [vmem:[%s338] sm:%s3] %v337
    %s340 = scalar_lea.vmem %s0, 308
    %v341 = vld [vmem:[%s340] sm:%s3]
    %s342 = scalar_lea.vmem [#allocation0], 616
    %343 = vst [vmem:[%s342] sm:%s3] %v341
    %s344 = scalar_lea.vmem %s0, 304
    %v345 = vld [vmem:[%s344] sm:%s3]
    %s346 = scalar_lea.vmem [#allocation0], 608
    %347 = vst [vmem:[%s346] sm:%s3] %v345
    %s348 = scalar_lea.vmem %s0, 300
    %v349 = vld [vmem:[%s348] sm:%s3]
    %s350 = scalar_lea.vmem [#allocation0], 600
    %351 = vst [vmem:[%s350] sm:%s3] %v349
    %s352 = scalar_lea.vmem %s0, 296
    %v353 = vld [vmem:[%s352] sm:%s3]
    %s354 = scalar_lea.vmem [#allocation0], 592
    %355 = vst [vmem:[%s354] sm:%s3] %v353
    %s356 = scalar_lea.vmem %s0, 292
    %v357 = vld [vmem:[%s356] sm:%s3]
    %s358 = scalar_lea.vmem [#allocation0], 584
    %359 = vst [vmem:[%s358] sm:%s3] %v357
    %s360 = scalar_lea.vmem %s0, 288
    %v361 = vld [vmem:[%s360] sm:%s3]
    %s362 = scalar_lea.vmem [#allocation0], 576
    %363 = vst [vmem:[%s362] sm:%s3] %v361
    %s364 = scalar_lea.vmem %s0, 284
    %v365 = vld [vmem:[%s364] sm:%s3]
    %s366 = scalar_lea.vmem [#allocation0], 568
    %367 = vst [vmem:[%s366] sm:%s3] %v365
    %s368 = scalar_lea.vmem %s0, 280
    %v369 = vld [vmem:[%s368] sm:%s3]
    %s370 = scalar_lea.vmem [#allocation0], 560
    %371 = vst [vmem:[%s370] sm:%s3] %v369
    %s372 = scalar_lea.vmem %s0, 276
    %v373 = vld [vmem:[%s372] sm:%s3]
    %s374 = scalar_lea.vmem [#allocation0], 552
    %375 = vst [vmem:[%s374] sm:%s3] %v373
    %s376 = scalar_lea.vmem %s0, 272
    %v377 = vld [vmem:[%s376] sm:%s3]
    %s378 = scalar_lea.vmem [#allocation0], 544
    %379 = vst [vmem:[%s378] sm:%s3] %v377
    %s380 = scalar_lea.vmem %s0, 268
    %v381 = vld [vmem:[%s380] sm:%s3]
    %s382 = scalar_lea.vmem [#allocation0], 536
    %383 = vst [vmem:[%s382] sm:%s3] %v381
    %s384 = scalar_lea.vmem %s0, 264
    %v385 = vld [vmem:[%s384] sm:%s3]
    %s386 = scalar_lea.vmem [#allocation0], 528
    %387 = vst [vmem:[%s386] sm:%s3] %v385
    %s388 = scalar_lea.vmem %s0, 260
    %v389 = vld [vmem:[%s388] sm:%s3]
    %s390 = scalar_lea.vmem [#allocation0], 520
    %391 = vst [vmem:[%s390] sm:%s3] %v389
    %s392 = scalar_lea.vmem %s0, 256
    %v393 = vld [vmem:[%s392] sm:%s3]
    %s394 = scalar_lea.vmem [#allocation0], 512
    %395 = vst [vmem:[%s394] sm:%s3] %v393
    %s396 = scalar_lea.vmem %s0, 252
    %v397 = vld [vmem:[%s396] sm:%s3]
    %s398 = scalar_lea.vmem [#allocation0], 504
    %399 = vst [vmem:[%s398] sm:%s3] %v397
    %s400 = scalar_lea.vmem %s0, 248
    %v401 = vld [vmem:[%s400] sm:%s3]
    %s402 = scalar_lea.vmem [#allocation0], 496
    %403 = vst [vmem:[%s402] sm:%s3] %v401
    %s404 = scalar_lea.vmem %s0, 244
    %v405 = vld [vmem:[%s404] sm:%s3]
    %s406 = scalar_lea.vmem [#allocation0], 488
    %407 = vst [vmem:[%s406] sm:%s3] %v405
    %s408 = scalar_lea.vmem %s0, 240
    %v409 = vld [vmem:[%s408] sm:%s3]
    %s410 = scalar_lea.vmem [#allocation0], 480
    %411 = vst [vmem:[%s410] sm:%s3] %v409
    %s412 = scalar_lea.vmem %s0, 236
    %v413 = vld [vmem:[%s412] sm:%s3]
    %s414 = scalar_lea.vmem [#allocation0], 472
    %415 = vst [vmem:[%s414] sm:%s3] %v413
    %s416 = scalar_lea.vmem %s0, 232
    %v417 = vld [vmem:[%s416] sm:%s3]
    %s418 = scalar_lea.vmem [#allocation0], 464
    %419 = vst [vmem:[%s418] sm:%s3] %v417
    %s420 = scalar_lea.vmem %s0, 228
    %v421 = vld [vmem:[%s420] sm:%s3]
    %s422 = scalar_lea.vmem [#allocation0], 456
    %423 = vst [vmem:[%s422] sm:%s3] %v421
    %s424 = scalar_lea.vmem %s0, 224
    %v425 = vld [vmem:[%s424] sm:%s3]
    %s426 = scalar_lea.vmem [#allocation0], 448
    %427 = vst [vmem:[%s426] sm:%s3] %v425
    %s428 = scalar_lea.vmem %s0, 220
    %v429 = vld [vmem:[%s428] sm:%s3]
    %s430 = scalar_lea.vmem [#allocation0], 440
    %431 = vst [vmem:[%s430] sm:%s3] %v429
    %s432 = scalar_lea.vmem %s0, 216
    %v433 = vld [vmem:[%s432] sm:%s3]
    %s434 = scalar_lea.vmem [#allocation0], 432
    %435 = vst [vmem:[%s434] sm:%s3] %v433
    %s436 = scalar_lea.vmem %s0, 212
    %v437 = vld [vmem:[%s436] sm:%s3]
    %s438 = scalar_lea.vmem [#allocation0], 424
    %439 = vst [vmem:[%s438] sm:%s3] %v437
    %s440 = scalar_lea.vmem %s0, 208
    %v441 = vld [vmem:[%s440] sm:%s3]
    %s442 = scalar_lea.vmem [#allocation0], 416
    %443 = vst [vmem:[%s442] sm:%s3] %v441
    %s444 = scalar_lea.vmem %s0, 204
    %v445 = vld [vmem:[%s444] sm:%s3]
    %s446 = scalar_lea.vmem [#allocation0], 408
    %447 = vst [vmem:[%s446] sm:%s3] %v445
    %s448 = scalar_lea.vmem %s0, 200
    %v449 = vld [vmem:[%s448] sm:%s3]
    %s450 = scalar_lea.vmem [#allocation0], 400
    %451 = vst [vmem:[%s450] sm:%s3] %v449
    %s452 = scalar_lea.vmem %s0, 196
    %v453 = vld [vmem:[%s452] sm:%s3]
    %s454 = scalar_lea.vmem [#allocation0], 392
    %455 = vst [vmem:[%s454] sm:%s3] %v453
    %s456 = scalar_lea.vmem %s0, 192
    %v457 = vld [vmem:[%s456] sm:%s3]
    %s458 = scalar_lea.vmem [#allocation0], 384
    %459 = vst [vmem:[%s458] sm:%s3] %v457
    %s460 = scalar_lea.vmem %s0, 188
    %v461 = vld [vmem:[%s460] sm:%s3]
    %s462 = scalar_lea.vmem [#allocation0], 376
    %463 = vst [vmem:[%s462] sm:%s3] %v461
    %s464 = scalar_lea.vmem %s0, 184
    %v465 = vld [vmem:[%s464] sm:%s3]
    %s466 = scalar_lea.vmem [#allocation0], 368
    %467 = vst [vmem:[%s466] sm:%s3] %v465
    %s468 = scalar_lea.vmem %s0, 180
    %v469 = vld [vmem:[%s468] sm:%s3]
    %s470 = scalar_lea.vmem [#allocation0], 360
    %471 = vst [vmem:[%s470] sm:%s3] %v469
    %s472 = scalar_lea.vmem %s0, 176
    %v473 = vld [vmem:[%s472] sm:%s3]
    %s474 = scalar_lea.vmem [#allocation0], 352
    %475 = vst [vmem:[%s474] sm:%s3] %v473
    %s476 = scalar_lea.vmem %s0, 172
    %v477 = vld [vmem:[%s476] sm:%s3]
    %s478 = scalar_lea.vmem [#allocation0], 344
    %479 = vst [vmem:[%s478] sm:%s3] %v477
    %s480 = scalar_lea.vmem %s0, 168
    %v481 = vld [vmem:[%s480] sm:%s3]
    %s482 = scalar_lea.vmem [#allocation0], 336
    %483 = vst [vmem:[%s482] sm:%s3] %v481
    %s484 = scalar_lea.vmem %s0, 164
    %v485 = vld [vmem:[%s484] sm:%s3]
    %s486 = scalar_lea.vmem [#allocation0], 328
    %487 = vst [vmem:[%s486] sm:%s3] %v485
    %s488 = scalar_lea.vmem %s0, 160
    %v489 = vld [vmem:[%s488] sm:%s3]
    %s490 = scalar_lea.vmem [#allocation0], 320
    %491 = vst [vmem:[%s490] sm:%s3] %v489
    %s492 = scalar_lea.vmem %s0, 156
    %v493 = vld [vmem:[%s492] sm:%s3]
    %s494 = scalar_lea.vmem [#allocation0], 312
    %495 = vst [vmem:[%s494] sm:%s3] %v493
    %s496 = scalar_lea.vmem %s0, 152
    %v497 = vld [vmem:[%s496] sm:%s3]
    %s498 = scalar_lea.vmem [#allocation0], 304
    %499 = vst [vmem:[%s498] sm:%s3] %v497
    %s500 = scalar_lea.vmem %s0, 148
    %v501 = vld [vmem:[%s500] sm:%s3]
    %s502 = scalar_lea.vmem [#allocation0], 296
    %503 = vst [vmem:[%s502] sm:%s3] %v501
    %s504 = scalar_lea.vmem %s0, 144
    %v505 = vld [vmem:[%s504] sm:%s3]
    %s506 = scalar_lea.vmem [#allocation0], 288
    %507 = vst [vmem:[%s506] sm:%s3] %v505
    %s508 = scalar_lea.vmem %s0, 140
    %v509 = vld [vmem:[%s508] sm:%s3]
    %s510 = scalar_lea.vmem [#allocation0], 280
    %511 = vst [vmem:[%s510] sm:%s3] %v509
    %s512 = scalar_lea.vmem %s0, 136
    %v513 = vld [vmem:[%s512] sm:%s3]
    %s514 = scalar_lea.vmem [#allocation0], 272
    %515 = vst [vmem:[%s514] sm:%s3] %v513
    %s516 = scalar_lea.vmem %s0, 132
    %v517 = vld [vmem:[%s516] sm:%s3]
    %s518 = scalar_lea.vmem [#allocation0], 264
    %519 = vst [vmem:[%s518] sm:%s3] %v517
    %s520 = scalar_lea.vmem %s0, 128
    %v521 = vld [vmem:[%s520] sm:%s3]
    %s522 = scalar_lea.vmem [#allocation0], 256
    %523 = vst [vmem:[%s522] sm:%s3] %v521
    %s524 = scalar_lea.vmem %s0, 124
    %v525 = vld [vmem:[%s524] sm:%s3]
    %s526 = scalar_lea.vmem [#allocation0], 248
    %527 = vst [vmem:[%s526] sm:%s3] %v525
    %s528 = scalar_lea.vmem %s0, 120
    %v529 = vld [vmem:[%s528] sm:%s3]
    %s530 = scalar_lea.vmem [#allocation0], 240
    %531 = vst [vmem:[%s530] sm:%s3] %v529
    %s532 = scalar_lea.vmem %s0, 116
    %v533 = vld [vmem:[%s532] sm:%s3]
    %s534 = scalar_lea.vmem [#allocation0], 232
    %535 = vst [vmem:[%s534] sm:%s3] %v533
    %s536 = scalar_lea.vmem %s0, 112
    %v537 = vld [vmem:[%s536] sm:%s3]
    %s538 = scalar_lea.vmem [#allocation0], 224
    %539 = vst [vmem:[%s538] sm:%s3] %v537
    %s540 = scalar_lea.vmem %s0, 108
    %v541 = vld [vmem:[%s540] sm:%s3]
    %s542 = scalar_lea.vmem [#allocation0], 216
    %543 = vst [vmem:[%s542] sm:%s3] %v541
    %s544 = scalar_lea.vmem %s0, 104
    %v545 = vld [vmem:[%s544] sm:%s3]
    %s546 = scalar_lea.vmem [#allocation0], 208
    %547 = vst [vmem:[%s546] sm:%s3] %v545
    %s548 = scalar_lea.vmem %s0, 100
    %v549 = vld [vmem:[%s548] sm:%s3]
    %s550 = scalar_lea.vmem [#allocation0], 200
    %551 = vst [vmem:[%s550] sm:%s3] %v549
    %s552 = scalar_lea.vmem %s0, 96
    %v553 = vld [vmem:[%s552] sm:%s3]
    %s554 = scalar_lea.vmem [#allocation0], 192
    %555 = vst [vmem:[%s554] sm:%s3] %v553
    %s556 = scalar_lea.vmem %s0, 92
    %v557 = vld [vmem:[%s556] sm:%s3]
    %s558 = scalar_lea.vmem [#allocation0], 184
    %559 = vst [vmem:[%s558] sm:%s3] %v557
    %s560 = scalar_lea.vmem %s0, 88
    %v561 = vld [vmem:[%s560] sm:%s3]
    %s562 = scalar_lea.vmem [#allocation0], 176
    %563 = vst [vmem:[%s562] sm:%s3] %v561
    %s564 = scalar_lea.vmem %s0, 84
    %v565 = vld [vmem:[%s564] sm:%s3]
    %s566 = scalar_lea.vmem [#allocation0], 168
    %567 = vst [vmem:[%s566] sm:%s3] %v565
    %s568 = scalar_lea.vmem %s0, 80
    %v569 = vld [vmem:[%s568] sm:%s3]
    %s570 = scalar_lea.vmem [#allocation0], 160
    %571 = vst [vmem:[%s570] sm:%s3] %v569
    %s572 = scalar_lea.vmem %s0, 76
    %v573 = vld [vmem:[%s572] sm:%s3]
    %s574 = scalar_lea.vmem [#allocation0], 152
    %575 = vst [vmem:[%s574] sm:%s3] %v573
    %s576 = scalar_lea.vmem %s0, 72
    %v577 = vld [vmem:[%s576] sm:%s3]
    %s578 = scalar_lea.vmem [#allocation0], 144
    %579 = vst [vmem:[%s578] sm:%s3] %v577
    %s580 = scalar_lea.vmem %s0, 68
    %v581 = vld [vmem:[%s580] sm:%s3]
    %s582 = scalar_lea.vmem [#allocation0], 136
    %583 = vst [vmem:[%s582] sm:%s3] %v581
    %s584 = scalar_lea.vmem %s0, 64
    %v585 = vld [vmem:[%s584] sm:%s3]
    %s586 = scalar_lea.vmem [#allocation0], 128
    %587 = vst [vmem:[%s586] sm:%s3] %v585
    %s588 = scalar_lea.vmem %s0, 60
    %v589 = vld [vmem:[%s588] sm:%s3]
    %s590 = scalar_lea.vmem [#allocation0], 120
    %591 = vst [vmem:[%s590] sm:%s3] %v589
    %s592 = scalar_lea.vmem %s0, 56
    %v593 = vld [vmem:[%s592] sm:%s3]
    %s594 = scalar_lea.vmem [#allocation0], 112
    %595 = vst [vmem:[%s594] sm:%s3] %v593
    %s596 = scalar_lea.vmem %s0, 52
    %v597 = vld [vmem:[%s596] sm:%s3]
    %s598 = scalar_lea.vmem [#allocation0], 104
    %599 = vst [vmem:[%s598] sm:%s3] %v597
    %s600 = scalar_lea.vmem %s0, 48
    %v601 = vld [vmem:[%s600] sm:%s3]
    %s602 = scalar_lea.vmem [#allocation0], 96
    %603 = vst [vmem:[%s602] sm:%s3] %v601
    %s604 = scalar_lea.vmem %s0, 44
    %v605 = vld [vmem:[%s604] sm:%s3]
    %s606 = scalar_lea.vmem [#allocation0], 88
    %607 = vst [vmem:[%s606] sm:%s3] %v605
    %s608 = scalar_lea.vmem %s0, 40
    %v609 = vld [vmem:[%s608] sm:%s3]
    %s610 = scalar_lea.vmem [#allocation0], 80
    %611 = vst [vmem:[%s610] sm:%s3] %v609
    %s612 = scalar_lea.vmem %s0, 36
    %v613 = vld [vmem:[%s612] sm:%s3]
    %s614 = scalar_lea.vmem [#allocation0], 72
    %615 = vst [vmem:[%s614] sm:%s3] %v613
    %s616 = scalar_lea.vmem %s0, 32
    %v617 = vld [vmem:[%s616] sm:%s3]
    %s618 = scalar_lea.vmem [#allocation0], 64
    %619 = vst [vmem:[%s618] sm:%s3] %v617
    %s620 = scalar_lea.vmem %s0, 28
    %v621 = vld [vmem:[%s620] sm:%s3]
    %s622 = scalar_lea.vmem [#allocation0], 56
    %623 = vst [vmem:[%s622] sm:%s3] %v621
    %s624 = scalar_lea.vmem %s0, 24
    %v625 = vld [vmem:[%s624] sm:%s3]
    %s626 = scalar_lea.vmem [#allocation0], 48
    %627 = vst [vmem:[%s626] sm:%s3] %v625
    %s628 = scalar_lea.vmem %s0, 20
    %v629 = vld [vmem:[%s628] sm:%s3]
    %s630 = scalar_lea.vmem [#allocation0], 40
    %631 = vst [vmem:[%s630] sm:%s3] %v629
    %s632 = scalar_lea.vmem %s0, 16
    %v633 = vld [vmem:[%s632] sm:%s3]
    %s634 = scalar_lea.vmem [#allocation0], 32
    %635 = vst [vmem:[%s634] sm:%s3] %v633
    %s636 = scalar_lea.vmem %s0, 12
    %v637 = vld [vmem:[%s636] sm:%s3]
    %s638 = scalar_lea.vmem [#allocation0], 24
    %639 = vst [vmem:[%s638] sm:%s3] %v637
    %s640 = scalar_lea.vmem %s0, 8
    %v641 = vld [vmem:[%s640] sm:%s3]
    %s642 = scalar_lea.vmem [#allocation0], 16
    %643 = vst [vmem:[%s642] sm:%s3] %v641
    %s644 = scalar_lea.vmem %s0, 4
    %v645 = vld [vmem:[%s644] sm:%s3]
    %s646 = scalar_lea.vmem [#allocation0], 8
    %647 = vst [vmem:[%s646] sm:%s3] %v645
    %v648 = vld [vmem:[%s0] sm:%s3]
    %649 = vst [vmem:[#allocation0] sm:%s3] %v648
    %v650 = vld [vmem:[#allocation0] ss:$8 sm:$0xf]
    %v651 = vld [vmem:[#allocation0] ss:$8 sm:$0xf0]
    %vm652 = vcmask 1047556
    %v653 = vsel %vm652, %v651, %v650
    %vm654 = vcmask 261120
    %655 = vst.msk [vmem:[%s1] sm:$0xff] %vm654, %v653
    %s656 = scalar_lea.vmem [#allocation0], 64
    %v657 = vld [vmem:[%s656] ss:$8 sm:$0xf]
    %s658 = scalar_lea.vmem [#allocation0], 64
    %v659 = vld [vmem:[%s658] ss:$8 sm:$0xf0]
    %vm660 = vcmask 1047556
    %v661 = vsel %vm660, %v659, %v657
    %vm662 = vcmask 261120
    %s663 = scalar_lea.vmem %s1, 8
    %664 = vst.msk [vmem:[%s663] sm:$0xff] %vm662, %v661
    %s665 = scalar_lea.vmem [#allocation0], 128
    %v666 = vld [vmem:[%s665] ss:$8 sm:$0xf]
    %s667 = scalar_lea.vmem [#allocation0], 128
    %v668 = vld [vmem:[%s667] ss:$8 sm:$0xf0]
    %vm669 = vcmask 1047556
    %v670 = vsel %vm669, %v668, %v666
    %vm671 = vcmask 261120
    %s672 = scalar_lea.vmem %s1, 16
    %673 = vst.msk [vmem:[%s672] sm:$0x3] %vm671, %v670
    %s674 = scalar_lea.vmem %s1, 22
    %675 = vst.msk [vmem:[%s674] sm:$0xfc] %vm671, %v670
    %s676 = scalar_lea.vmem [#allocation0], 192
    %v677 = vld [vmem:[%s676] ss:$8 sm:$0xf]
    %s678 = scalar_lea.vmem [#allocation0], 192
    %v679 = vld [vmem:[%s678] ss:$8 sm:$0xf0]
    %vm680 = vcmask 1047556
    %v681 = vsel %vm680, %v679, %v677
    %vm682 = vcmask 261120
    %s683 = scalar_lea.vmem %s1, 30
    %684 = vst.msk [vmem:[%s683] sm:$0xff] %vm682, %v681
    %s685 = scalar_lea.vmem [#allocation0], 256
    %v686 = vld [vmem:[%s685] ss:$8 sm:$0xf]
    %s687 = scalar_lea.vmem [#allocation0], 256
    %v688 = vld [vmem:[%s687] ss:$8 sm:$0xf0]
    %vm689 = vcmask 1047556
    %v690 = vsel %vm689, %v688, %v686
    %vm691 = vcmask 261120
    %s692 = scalar_lea.vmem %s1, 38
    %693 = vst.msk [vmem:[%s692] sm:$0xf] %vm691, %v690
    %s694 = scalar_lea.vmem %s1, 44
    %695 = vst.msk [vmem:[%s694] sm:$0xf0] %vm691, %v690
    %s696 = scalar_lea.vmem [#allocation0], 320
    %v697 = vld [vmem:[%s696] ss:$8 sm:$0xf]
    %s698 = scalar_lea.vmem [#allocation0], 320
    %v699 = vld [vmem:[%s698] ss:$8 sm:$0xf0]
    %vm700 = vcmask 1047556
    %v701 = vsel %vm700, %v699, %v697
    %vm702 = vcmask 261120
    %s703 = scalar_lea.vmem %s1, 52
    %704 = vst.msk [vmem:[%s703] sm:$0xff] %vm702, %v701
    %s705 = scalar_lea.vmem [#allocation0], 384
    %v706 = vld [vmem:[%s705] ss:$8 sm:$0xf]
    %s707 = scalar_lea.vmem [#allocation0], 384
    %v708 = vld [vmem:[%s707] ss:$8 sm:$0xf0]
    %vm709 = vcmask 1047556
    %v710 = vsel %vm709, %v708, %v706
    %vm711 = vcmask 261120
    %s712 = scalar_lea.vmem %s1, 60
    %713 = vst.msk [vmem:[%s712] sm:$0x3f] %vm711, %v710
    %s714 = scalar_lea.vmem %s1, 66
    %715 = vst.msk [vmem:[%s714] sm:$0xc0] %vm711, %v710
    %s716 = scalar_lea.vmem [#allocation0], 448
    %v717 = vld [vmem:[%s716] ss:$8 sm:$0xf]
    %s718 = scalar_lea.vmem [#allocation0], 448
    %v719 = vld [vmem:[%s718] ss:$8 sm:$0xf0]
    %vm720 = vcmask 1047556
    %v721 = vsel %vm720, %v719, %v717
    %vm722 = vcmask 261120
    %s723 = scalar_lea.vmem %s1, 74
    %724 = vst.msk [vmem:[%s723] sm:$0xff] %vm722, %v721
    %s725 = scalar_lea.vmem [#allocation0], 512
    %v726 = vld [vmem:[%s725] ss:$8 sm:$0xf]
    %s727 = scalar_lea.vmem [#allocation0], 512
    %v728 = vld [vmem:[%s727] ss:$8 sm:$0xf0]
    %vm729 = vcmask 1047556
    %v730 = vsel %vm729, %v728, %v726
    %vm731 = vcmask 261120
    %s732 = scalar_lea.vmem %s1, 82
    %733 = vst.msk [vmem:[%s732] sm:$0xff] %vm731, %v730
    %s734 = scalar_lea.vmem [#allocation0], 576
    %v735 = vld [vmem:[%s734] ss:$8 sm:$0xf]
    %s736 = scalar_lea.vmem [#allocation0], 576
    %v737 = vld [vmem:[%s736] ss:$8 sm:$0xf0]
    %vm738 = vcmask 1047556
    %v739 = vsel %vm738, %v737, %v735
    %vm740 = vcmask 261120
    %s741 = scalar_lea.vmem %s1, 96
    %742 = vst.msk [vmem:[%s741] sm:$0xff] %vm740, %v739
    %s743 = scalar_lea.vmem [#allocation0], 640
    %v744 = vld [vmem:[%s743] ss:$8 sm:$0xf]
    %s745 = scalar_lea.vmem [#allocation0], 640
    %v746 = vld [vmem:[%s745] ss:$8 sm:$0xf0]
    %vm747 = vcmask 1047556
    %v748 = vsel %vm747, %v746, %v744
    %vm749 = vcmask 261120
    %s750 = scalar_lea.vmem %s1, 104
    %751 = vst.msk [vmem:[%s750] sm:$0xff] %vm749, %v748
    %s752 = scalar_lea.vmem [#allocation0], 704
    %v753 = vld [vmem:[%s752] ss:$8 sm:$0xf]
    %s754 = scalar_lea.vmem [#allocation0], 704
    %v755 = vld [vmem:[%s754] ss:$8 sm:$0xf0]
    %vm756 = vcmask 1047556
    %v757 = vsel %vm756, %v755, %v753
    %vm758 = vcmask 261120
    %s759 = scalar_lea.vmem %s1, 112
    %760 = vst.msk [vmem:[%s759] sm:$0x3] %vm758, %v757
    %s761 = scalar_lea.vmem %s1, 118
    %762 = vst.msk [vmem:[%s761] sm:$0xfc] %vm758, %v757
    %s763 = scalar_lea.vmem [#allocation0], 768
    %v764 = vld [vmem:[%s763] ss:$8 sm:$0xf]
    %s765 = scalar_lea.vmem [#allocation0], 768
    %v766 = vld [vmem:[%s765] ss:$8 sm:$0xf0]
    %vm767 = vcmask 1047556
    %v768 = vsel %vm767, %v766, %v764
    %vm769 = vcmask 261120
    %s770 = scalar_lea.vmem %s1, 126
    %771 = vst.msk [vmem:[%s770] sm:$0xff] %vm769, %v768
    %s772 = scalar_lea.vmem [#allocation0], 832
    %v773 = vld [vmem:[%s772] ss:$8 sm:$0xf]
    %s774 = scalar_lea.vmem [#allocation0], 832
    %v775 = vld [vmem:[%s774] ss:$8 sm:$0xf0]
    %vm776 = vcmask 1047556
    %v777 = vsel %vm776, %v775, %v773
    %vm778 = vcmask 261120
    %s779 = scalar_lea.vmem %s1, 134
    %780 = vst.msk [vmem:[%s779] sm:$0xf] %vm778, %v777
    %s781 = scalar_lea.vmem %s1, 140
    %782 = vst.msk [vmem:[%s781] sm:$0xf0] %vm778, %v777
    %s783 = scalar_lea.vmem [#allocation0], 896
    %v784 = vld [vmem:[%s783] ss:$8 sm:$0xf]
    %s785 = scalar_lea.vmem [#allocation0], 896
    %v786 = vld [vmem:[%s785] ss:$8 sm:$0xf0]
    %vm787 = vcmask 1047556
    %v788 = vsel %vm787, %v786, %v784
    %vm789 = vcmask 261120
    %s790 = scalar_lea.vmem %s1, 148
    %791 = vst.msk [vmem:[%s790] sm:$0xff] %vm789, %v788
    %s792 = scalar_lea.vmem [#allocation0], 960
    %v793 = vld [vmem:[%s792] ss:$8 sm:$0xf]
    %s794 = scalar_lea.vmem [#allocation0], 960
    %v795 = vld [vmem:[%s794] ss:$8 sm:$0xf0]
    %vm796 = vcmask 1047556
    %v797 = vsel %vm796, %v795, %v793
    %vm798 = vcmask 261120
    %s799 = scalar_lea.vmem %s1, 156
    %800 = vst.msk [vmem:[%s799] sm:$0x3f] %vm798, %v797
    %s801 = scalar_lea.vmem %s1, 162
    %802 = vst.msk [vmem:[%s801] sm:$0xc0] %vm798, %v797
    %s803 = scalar_lea.vmem [#allocation0], 1024
    %v804 = vld [vmem:[%s803] ss:$8 sm:$0xf]
    %s805 = scalar_lea.vmem [#allocation0], 1024
    %v806 = vld [vmem:[%s805] ss:$8 sm:$0xf0]
    %vm807 = vcmask 1047556
    %v808 = vsel %vm807, %v806, %v804
    %vm809 = vcmask 261120
    %s810 = scalar_lea.vmem %s1, 170
    %811 = vst.msk [vmem:[%s810] sm:$0xff] %vm809, %v808
    %s812 = scalar_lea.vmem [#allocation0], 1088
    %v813 = vld [vmem:[%s812] ss:$8 sm:$0xf]
    %s814 = scalar_lea.vmem [#allocation0], 1088
    %v815 = vld [vmem:[%s814] ss:$8 sm:$0xf0]
    %vm816 = vcmask 1047556
    %v817 = vsel %vm816, %v815, %v813
    %vm818 = vcmask 261120
    %s819 = scalar_lea.vmem %s1, 178
    %820 = vst.msk [vmem:[%s819] sm:$0xff] %vm818, %v817
    %s821 = scalar_lea.vmem [#allocation0], 1152
    %v822 = vld [vmem:[%s821] ss:$8 sm:$0xf]
    %s823 = scalar_lea.vmem [#allocation0], 1152
    %v824 = vld [vmem:[%s823] ss:$8 sm:$0xf0]
    %vm825 = vcmask 1047556
    %v826 = vsel %vm825, %v824, %v822
    %vm827 = vcmask 261120
    %s828 = scalar_lea.vmem %s1, 192
    %829 = vst.msk [vmem:[%s828] sm:$0xff] %vm827, %v826
    %s830 = scalar_lea.vmem [#allocation0], 1216
    %v831 = vld [vmem:[%s830] ss:$8 sm:$0xf]
    %s832 = scalar_lea.vmem [#allocation0], 1216
    %v833 = vld [vmem:[%s832] ss:$8 sm:$0xf0]
    %vm834 = vcmask 1047556
    %v835 = vsel %vm834, %v833, %v831
    %vm836 = vcmask 261120
    %s837 = scalar_lea.vmem %s1, 200
    %838 = vst.msk [vmem:[%s837] sm:$0xff] %vm836, %v835
    %s839 = scalar_lea.vmem [#allocation0], 1280
    %s840 = smov 3
    %v841 = vld [vmem:[%s839] ss:$8 sm:%s840]
    %vm842 = vcmask 261120
    %s843 = scalar_lea.vmem %s1, 208
    %844 = vst.msk [vmem:[%s843] sm:$0x3] %vm842, %v841
    %s845 = scalar_lea.vmem [#allocation0], 3
    %v846 = vld [vmem:[%s845] ss:$8 sm:$0xf]
    %s847 = scalar_lea.vmem [#allocation0], 3
    %v848 = vld [vmem:[%s847] ss:$8 sm:$0xf0]
    %vm849 = vcmask 1047556
    %v850 = vsel %vm849, %v848, %v846
    %851 = vrot.lane.b32.xlu0 %v850, 96
    %v852 = vpop.permute.xlu0 %851
    %vm853 = vcmask 1048320
    %854 = vst.msk [vmem:[%s1] sm:$0xff] %vm853, %v852
    %s855 = scalar_lea.vmem [#allocation0], 211
    %v856 = vld [vmem:[%s855] ss:$8 sm:$0xf]
    %s857 = scalar_lea.vmem [#allocation0], 211
    %v858 = vld [vmem:[%s857] ss:$8 sm:$0xf0]
    %vm859 = vcmask 1047556
    %v860 = vsel %vm859, %v858, %v856
    %861 = vrot.lane.b32.xlu0 %v860, 96
    %v862 = vpop.permute.xlu0 %861
    %vm863 = vcmask 1048320
    %s864 = scalar_lea.vmem %s1, 32
    %865 = vst.msk [vmem:[%s864] sm:$0xff] %vm863, %v862
    %s866 = scalar_lea.vmem [#allocation0], 419
    %s867 = smov 3
    %v868 = vld [vmem:[%s866] ss:$8 sm:%s867]
    %s869 = scalar_lea.vmem [#allocation0], 579
    %v870 = vld [vmem:[%s869] ss:$8 sm:$0x3c]
    %vm871 = vcmask 1045506
    %v872 = vsel %vm871, %v870, %v868
    %s873 = scalar_lea.vmem [#allocation0], 579
    %s874 = smov 192
    %v875 = vld [vmem:[%s873] ss:$8 sm:%s874]
    %vm876 = vcmask 1047558
    %v877 = vsel %vm876, %v875, %v872
    %878 = vrot.lane.b32.xlu0 %v877, 96
    %v879 = vpop.permute.xlu0 %878
    %vm880 = vcmask 1048320
    %s881 = scalar_lea.vmem %s1, 64
    %882 = vst.msk [vmem:[%s881] sm:$0x3] %vm880, %v879
    %s883 = scalar_lea.vmem %s1, 96
    %884 = vst.msk [vmem:[%s883] sm:$0xfc] %vm880, %v879
    %s885 = scalar_lea.vmem [#allocation0], 579
    %s886 = smov 3
    %v887 = vld [vmem:[%s885] ss:$8 sm:%s886]
    %s888 = scalar_lea.vmem [#allocation0], 787
    %v889 = vld [vmem:[%s888] ss:$8 sm:$0x3c]
    %vm890 = vcmask 1045506
    %v891 = vsel %vm890, %v889, %v887
    %s892 = scalar_lea.vmem [#allocation0], 787
    %s893 = smov 192
    %v894 = vld [vmem:[%s892] ss:$8 sm:%s893]
    %vm895 = vcmask 1047558
    %v896 = vsel %vm895, %v894, %v891
    %897 = vrot.lane.b32.xlu0 %v896, 96
    %v898 = vpop.permute.xlu0 %897
    %vm899 = vcmask 1048320
    %s900 = scalar_lea.vmem %s1, 96
    %901 = vst.msk [vmem:[%s900] sm:$0x3] %vm899, %v898
    %s902 = scalar_lea.vmem %s1, 128
    %903 = vst.msk [vmem:[%s902] sm:$0xfc] %vm899, %v898
    %s904 = scalar_lea.vmem [#allocation0], 787
    %s905 = smov 3
    %v906 = vld [vmem:[%s904] ss:$8 sm:%s905]
    %s907 = scalar_lea.vmem [#allocation0], 1155
    %v908 = vld [vmem:[%s907] ss:$8 sm:$0x3c]
    %vm909 = vcmask 1045506
    %v910 = vsel %vm909, %v908, %v906
    %s911 = scalar_lea.vmem [#allocation0], 1155
    %s912 = smov 192
    %v913 = vld [vmem:[%s911] ss:$8 sm:%s912]
    %vm914 = vcmask 1047558
    %v915 = vsel %vm914, %v913, %v910
    %916 = vrot.lane.b32.xlu0 %v915, 96
    %v917 = vpop.permute.xlu0 %916
    %vm918 = vcmask 1048320
    %s919 = scalar_lea.vmem %s1, 128
    %920 = vst.msk [vmem:[%s919] sm:$0x3] %vm918, %v917
    %s921 = scalar_lea.vmem %s1, 192
    %922 = vst.msk [vmem:[%s921] sm:$0xfc] %vm918, %v917
    %s923 = scalar_lea.vmem [#allocation0], 995
    %s924 = smov 3
    %v925 = vld [vmem:[%s923] ss:$8 sm:%s924]
    %s926 = scalar_lea.vmem [#allocation0], 51
    %v927 = vld [vmem:[%s926] ss:$8 sm:$0x3c]
    %vm928 = vcmask 1045506
    %v929 = vsel %vm928, %v927, %v925
    %s930 = scalar_lea.vmem [#allocation0], 51
    %s931 = smov 192
    %v932 = vld [vmem:[%s930] ss:$8 sm:%s931]
    %vm933 = vcmask 1047558
    %v934 = vsel %vm933, %v932, %v929
    %935 = vrot.lane.b32.xlu0 %v934, 96
    %v936 = vpop.permute.xlu0 %935
    %vm937 = vcmask 1048320
    %s938 = scalar_lea.vmem %s1, 160
    %939 = vst.msk [vmem:[%s938] sm:$0x3] %vm937, %v936
    %s940 = scalar_lea.vmem %s1, 6
    %941 = vst.msk [vmem:[%s940] sm:$0xfc] %vm937, %v936
    %s942 = scalar_lea.vmem [#allocation0], 1155
    %s943 = smov 3
    %v944 = vld [vmem:[%s942] ss:$8 sm:%s943]
    %s945 = scalar_lea.vmem [#allocation0], 259
    %s946 = smov 12
    %v947 = vld [vmem:[%s945] ss:$8 sm:%s946]
    %vm948 = vcmask 1043458
    %v949 = vsel %vm948, %v947, %v944
    %s950 = scalar_lea.vmem [#allocation0], 419
    %v951 = vld [vmem:[%s950] ss:$8 sm:$0xf0]
    %vm952 = vcmask 1047556
    %v953 = vsel %vm952, %v951, %v949
    %954 = vrot.lane.b32.xlu0 %v953, 96
    %v955 = vpop.permute.xlu0 %954
    %vm956 = vcmask 1048320
    %s957 = scalar_lea.vmem %s1, 192
    %958 = vst.msk [vmem:[%s957] sm:$0x3] %vm956, %v955
    %s959 = scalar_lea.vmem %s1, 38
    %960 = vst.msk [vmem:[%s959] sm:$0xc] %vm956, %v955
    %s961 = scalar_lea.vmem %s1, 70
    %962 = vst.msk [vmem:[%s961] sm:$0xf0] %vm956, %v955
    %s963 = scalar_lea.vmem [#allocation0], 435
    %s964 = smov 3
    %v965 = vld [vmem:[%s963] ss:$8 sm:%s964]
    %s966 = scalar_lea.vmem [#allocation0], 643
    %v967 = vld [vmem:[%s966] ss:$8 sm:$0x3c]
    %vm968 = vcmask 1045506
    %v969 = vsel %vm968, %v967, %v965
    %s970 = scalar_lea.vmem [#allocation0], 67
    %s971 = smov 192
    %v972 = vld [vmem:[%s970] ss:$8 sm:%s971]
    %vm973 = vcmask 1047558
    %v974 = vsel %vm973, %v972, %v969
    %975 = vrot.lane.b32.xlu0 %v974, 96
    %v976 = vpop.permute.xlu0 %975
    %vm977 = vcmask 1048320
    %s978 = scalar_lea.vmem %s1, 72
    %979 = vst.msk [vmem:[%s978] sm:$0x3] %vm977, %v976
    %s980 = scalar_lea.vmem %s1, 104
    %981 = vst.msk [vmem:[%s980] sm:$0x3c] %vm977, %v976
    %s982 = scalar_lea.vmem %s1, 8
    %983 = vst.msk [vmem:[%s982] sm:$0xc0] %vm977, %v976
    %s984 = scalar_lea.vmem [#allocation0], 643
    %s985 = smov 3
    %v986 = vld [vmem:[%s984] ss:$8 sm:%s985]
    %s987 = scalar_lea.vmem [#allocation0], 1011
    %v988 = vld [vmem:[%s987] ss:$8 sm:$0x3c]
    %vm989 = vcmask 1045506
    %v990 = vsel %vm989, %v988, %v986
    %s991 = scalar_lea.vmem [#allocation0], 435
    %s992 = smov 192
    %v993 = vld [vmem:[%s991] ss:$8 sm:%s992]
    %vm994 = vcmask 1047558
    %v995 = vsel %vm994, %v993, %v990
    %996 = vrot.lane.b32.xlu0 %v995, 96
    %v997 = vpop.permute.xlu0 %996
    %vm998 = vcmask 1048320
    %s999 = scalar_lea.vmem %s1, 104
    %1000 = vst.msk [vmem:[%s999] sm:$0x3] %vm998, %v997
    %s1001 = scalar_lea.vmem %s1, 168
    %1002 = vst.msk [vmem:[%s1001] sm:$0x3c] %vm998, %v997
    %s1003 = scalar_lea.vmem %s1, 72
    %1004 = vst.msk [vmem:[%s1003] sm:$0xc0] %vm998, %v997
    %s1005 = scalar_lea.vmem [#allocation0], 851
    %s1006 = smov 3
    %v1007 = vld [vmem:[%s1005] ss:$8 sm:%s1006]
    %s1008 = scalar_lea.vmem [#allocation0], 1219
    %v1009 = vld [vmem:[%s1008] ss:$8 sm:$0x3c]
    %vm1010 = vcmask 1045506
    %v1011 = vsel %vm1010, %v1009, %v1007
    %s1012 = scalar_lea.vmem [#allocation0], 643
    %s1013 = smov 192
    %v1014 = vld [vmem:[%s1012] ss:$8 sm:%s1013]
    %vm1015 = vcmask 1047558
    %v1016 = vsel %vm1015, %v1014, %v1011
    %1017 = vrot.lane.b32.xlu0 %v1016, 96
    %v1018 = vpop.permute.xlu0 %1017
    %vm1019 = vcmask 1048320
    %s1020 = scalar_lea.vmem %s1, 136
    %1021 = vst.msk [vmem:[%s1020] sm:$0x3] %vm1019, %v1018
    %s1022 = scalar_lea.vmem %s1, 200
    %1023 = vst.msk [vmem:[%s1022] sm:$0x3c] %vm1019, %v1018
    %s1024 = scalar_lea.vmem %s1, 104
    %1025 = vst.msk [vmem:[%s1024] sm:$0xc0] %vm1019, %v1018
    %s1026 = scalar_lea.vmem [#allocation0], 1011
    %s1027 = smov 3
    %v1028 = vld [vmem:[%s1026] ss:$8 sm:%s1027]
    %s1029 = scalar_lea.vmem [#allocation0], 1043
    %s1030 = smov 12
    %v1031 = vld [vmem:[%s1029] ss:$8 sm:%s1030]
    %vm1032 = vcmask 1043458
    %v1033 = vsel %vm1032, %v1031, %v1028
    %s1034 = scalar_lea.vmem [#allocation0], 99
    %s1035 = smov 48
    %v1036 = vld [vmem:[%s1034] ss:$8 sm:%s1035]
    %vm1037 = vcmask 1045508
    %v1038 = vsel %vm1037, %v1036, %v1033
    %s1039 = scalar_lea.vmem [#allocation0], 259
    %s1040 = smov 192
    %v1041 = vld [vmem:[%s1039] ss:$8 sm:%s1040]
    %vm1042 = vcmask 1047558
    %v1043 = vsel %vm1042, %v1041, %v1038
    %1044 = vrot.lane.b32.xlu0 %v1043, 96
    %v1045 = vpop.permute.xlu0 %1044
    %vm1046 = vcmask 1048320
    %s1047 = scalar_lea.vmem %s1, 168
    %1048 = vst.msk [vmem:[%s1047] sm:$0x3] %vm1046, %v1045
    %s1049 = scalar_lea.vmem %s1, 172
    %1050 = vst.msk [vmem:[%s1049] sm:$0xc] %vm1046, %v1045
    %s1051 = scalar_lea.vmem %s1, 12
    %1052 = vst.msk [vmem:[%s1051] sm:$0x30] %vm1046, %v1045
    %s1053 = scalar_lea.vmem %s1, 44
    %1054 = vst.msk [vmem:[%s1053] sm:$0xc0] %vm1046, %v1045
    %s1055 = scalar_lea.vmem [#allocation0], 1219
    %s1056 = smov 3
    %v1057 = vld [vmem:[%s1055] ss:$8 sm:%s1056]
    %s1058 = scalar_lea.vmem [#allocation0], 1251
    %s1059 = smov 12
    %v1060 = vld [vmem:[%s1058] ss:$8 sm:%s1059]
    %vm1061 = vcmask 1043458
    %v1062 = vsel %vm1061, %v1060, %v1057
    %s1063 = scalar_lea.vmem [#allocation0], 259
    %s1064 = smov 48
    %v1065 = vld [vmem:[%s1063] ss:$8 sm:%s1064]
    %vm1066 = vcmask 1045508
    %v1067 = vsel %vm1066, %v1065, %v1062
    %s1068 = scalar_lea.vmem [#allocation0], 467
    %s1069 = smov 192
    %v1070 = vld [vmem:[%s1068] ss:$8 sm:%s1069]
    %vm1071 = vcmask 1047558
    %v1072 = vsel %vm1071, %v1070, %v1067
    %1073 = vrot.lane.b32.xlu0 %v1072, 96
    %v1074 = vpop.permute.xlu0 %1073
    %vm1075 = vcmask 1048320
    %s1076 = scalar_lea.vmem %s1, 200
    %1077 = vst.msk [vmem:[%s1076] sm:$0x3] %vm1075, %v1074
    %s1078 = scalar_lea.vmem %s1, 204
    %1079 = vst.msk [vmem:[%s1078] sm:$0xc] %vm1075, %v1074
    %s1080 = scalar_lea.vmem %s1, 44
    %1081 = vst.msk [vmem:[%s1080] sm:$0x30] %vm1075, %v1074
    %s1082 = scalar_lea.vmem %s1, 76
    %1083 = vst.msk [vmem:[%s1082] sm:$0xc0] %vm1075, %v1074
    %s1084 = scalar_lea.vmem [#allocation0], 499
    %s1085 = smov 3
    %v1086 = vld [vmem:[%s1084] ss:$8 sm:%s1085]
    %s1087 = scalar_lea.vmem [#allocation0], 867
    %s1088 = smov 12
    %v1089 = vld [vmem:[%s1087] ss:$8 sm:%s1088]
    %vm1090 = vcmask 1043458
    %v1091 = vsel %vm1090, %v1089, %v1086
    %s1092 = scalar_lea.vmem [#allocation0], 291
    %v1093 = vld [vmem:[%s1092] ss:$8 sm:$0xf0]
    %vm1094 = vcmask 1047556
    %v1095 = vsel %vm1094, %v1093, %v1091
    %1096 = vrot.lane.b32.xlu0 %v1095, 96
    %v1097 = vpop.permute.xlu0 %1096
    %vm1098 = vcmask 1048320
    %s1099 = scalar_lea.vmem %s1, 80
    %1100 = vst.msk [vmem:[%s1099] sm:$0x3] %vm1098, %v1097
    %s1101 = scalar_lea.vmem %s1, 144
    %1102 = vst.msk [vmem:[%s1101] sm:$0xc] %vm1098, %v1097
    %s1103 = scalar_lea.vmem %s1, 48
    %1104 = vst.msk [vmem:[%s1103] sm:$0xf0] %vm1098, %v1097
    %s1105 = scalar_lea.vmem [#allocation0], 707
    %s1106 = smov 3
    %v1107 = vld [vmem:[%s1105] ss:$8 sm:%s1106]
    %s1108 = scalar_lea.vmem [#allocation0], 1075
    %s1109 = smov 12
    %v1110 = vld [vmem:[%s1108] ss:$8 sm:%s1109]
    %vm1111 = vcmask 1043458
    %v1112 = vsel %vm1111, %v1110, %v1107
    %s1113 = scalar_lea.vmem [#allocation0], 499
    %v1114 = vld [vmem:[%s1113] ss:$8 sm:$0xf0]
    %vm1115 = vcmask 1047556
    %v1116 = vsel %vm1115, %v1114, %v1112
    %1117 = vrot.lane.b32.xlu0 %v1116, 96
    %v1118 = vpop.permute.xlu0 %1117
    %vm1119 = vcmask 1048320
    %s1120 = scalar_lea.vmem %s1, 112
    %1121 = vst.msk [vmem:[%s1120] sm:$0x3] %vm1119, %v1118
    %s1122 = scalar_lea.vmem %s1, 176
    %1123 = vst.msk [vmem:[%s1122] sm:$0xc] %vm1119, %v1118
    %s1124 = scalar_lea.vmem %s1, 80
    %1125 = vst.msk [vmem:[%s1124] sm:$0xf0] %vm1119, %v1118
    %s1126 = scalar_lea.vmem [#allocation0], 867
    %s1127 = smov 3
    %v1128 = vld [vmem:[%s1126] ss:$8 sm:%s1127]
    %s1129 = scalar_lea.vmem [#allocation0], 883
    %v1130 = vld [vmem:[%s1129] ss:$8 sm:$0x3c]
    %vm1131 = vcmask 1045506
    %v1132 = vsel %vm1131, %v1130, %v1128
    %s1133 = scalar_lea.vmem [#allocation0], 99
    %s1134 = smov 192
    %v1135 = vld [vmem:[%s1133] ss:$8 sm:%s1134]
    %vm1136 = vcmask 1047558
    %v1137 = vsel %vm1136, %v1135, %v1132
    %1138 = vrot.lane.b32.xlu0 %v1137, 96
    %v1139 = vpop.permute.xlu0 %1138
    %vm1140 = vcmask 1048320
    %s1141 = scalar_lea.vmem %s1, 144
    %1142 = vst.msk [vmem:[%s1141] sm:$0x3] %vm1140, %v1139
    %s1143 = scalar_lea.vmem %s1, 146
    %1144 = vst.msk [vmem:[%s1143] sm:$0x3c] %vm1140, %v1139
    %s1145 = scalar_lea.vmem %s1, 18
    %1146 = vst.msk [vmem:[%s1145] sm:$0xc0] %vm1140, %v1139
    %s1147 = scalar_lea.vmem [#allocation0], 1075
    %s1148 = smov 3
    %v1149 = vld [vmem:[%s1147] ss:$8 sm:%s1148]
    %s1150 = scalar_lea.vmem [#allocation0], 1091
    %v1151 = vld [vmem:[%s1150] ss:$8 sm:$0x3c]
    %vm1152 = vcmask 1045506
    %v1153 = vsel %vm1152, %v1151, %v1149
    %s1154 = scalar_lea.vmem [#allocation0], 307
    %s1155 = smov 192
    %v1156 = vld [vmem:[%s1154] ss:$8 sm:%s1155]
    %vm1157 = vcmask 1047558
    %v1158 = vsel %vm1157, %v1156, %v1153
    %1159 = vrot.lane.b32.xlu0 %v1158, 96
    %v1160 = vpop.permute.xlu0 %1159
    %vm1161 = vcmask 1048320
    %s1162 = scalar_lea.vmem %s1, 176
    %1163 = vst.msk [vmem:[%s1162] sm:$0x3] %vm1161, %v1160
    %s1164 = scalar_lea.vmem %s1, 178
    %1165 = vst.msk [vmem:[%s1164] sm:$0x3c] %vm1161, %v1160
    %s1166 = scalar_lea.vmem %s1, 50
    %1167 = vst.msk [vmem:[%s1166] sm:$0xc0] %vm1161, %v1160
    %s1168 = scalar_lea.vmem [#allocation0], 1283
    %s1169 = smov 3
    %v1170 = vld [vmem:[%s1168] ss:$8 sm:%s1169]
    %s1171 = scalar_lea.vmem [#allocation0], 547
    %s1172 = smov 12
    %v1173 = vld [vmem:[%s1171] ss:$8 sm:%s1172]
    %vm1174 = vcmask 1043458
    %v1175 = vsel %vm1174, %v1173, %v1170
    %s1176 = scalar_lea.vmem [#allocation0], 131
    %v1177 = vld [vmem:[%s1176] ss:$8 sm:$0xf0]
    %vm1178 = vcmask 1047556
    %v1179 = vsel %vm1178, %v1177, %v1175
    %1180 = vrot.lane.b32.xlu0 %v1179, 96
    %v1181 = vpop.permute.xlu0 %1180
    %vm1182 = vcmask 1048320
    %s1183 = scalar_lea.vmem %s1, 208
    %1184 = vst.msk [vmem:[%s1183] sm:$0x3] %vm1182, %v1181
    %s1185 = scalar_lea.vmem %s1, 86
    %1186 = vst.msk [vmem:[%s1185] sm:$0xc] %vm1182, %v1181
    %s1187 = scalar_lea.vmem %s1, 22
    %1188 = vst.msk [vmem:[%s1187] sm:$0xf0] %vm1182, %v1181
    %s1189 = scalar_lea.vmem [#allocation0], 723
    %s1190 = smov 3
    %v1191 = vld [vmem:[%s1189] ss:$8 sm:%s1190]
    %s1192 = scalar_lea.vmem [#allocation0], 355
    %v1193 = vld [vmem:[%s1192] ss:$8 sm:$0x3c]
    %vm1194 = vcmask 1045506
    %v1195 = vsel %vm1194, %v1193, %v1191
    %s1196 = scalar_lea.vmem [#allocation0], 147
    %s1197 = smov 192
    %v1198 = vld [vmem:[%s1196] ss:$8 sm:%s1197]
    %vm1199 = vcmask 1047558
    %v1200 = vsel %vm1199, %v1198, %v1195
    %1201 = vrot.lane.b32.xlu0 %v1200, 96
    %v1202 = vpop.permute.xlu0 %1201
    %vm1203 = vcmask 1048320
    %s1204 = scalar_lea.vmem %s1, 120
    %1205 = vst.msk [vmem:[%s1204] sm:$0x3] %vm1203, %v1202
    %s1206 = scalar_lea.vmem %s1, 56
    %1207 = vst.msk [vmem:[%s1206] sm:$0x3c] %vm1203, %v1202
    %s1208 = scalar_lea.vmem %s1, 24
    %1209 = vst.msk [vmem:[%s1208] sm:$0xc0] %vm1203, %v1202
    %s1210 = scalar_lea.vmem [#allocation0], 931
    %s1211 = smov 3
    %v1212 = vld [vmem:[%s1210] ss:$8 sm:%s1211]
    %s1213 = scalar_lea.vmem [#allocation0], 723
    %v1214 = vld [vmem:[%s1213] ss:$8 sm:$0x3c]
    %vm1215 = vcmask 1045506
    %v1216 = vsel %vm1215, %v1214, %v1212
    %s1217 = scalar_lea.vmem [#allocation0], 355
    %s1218 = smov 192
    %v1219 = vld [vmem:[%s1217] ss:$8 sm:%s1218]
    %vm1220 = vcmask 1047558
    %v1221 = vsel %vm1220, %v1219, %v1216
    %1222 = vrot.lane.b32.xlu0 %v1221, 96
    %v1223 = vpop.permute.xlu0 %1222
    %vm1224 = vcmask 1048320
    %s1225 = scalar_lea.vmem %s1, 152
    %1226 = vst.msk [vmem:[%s1225] sm:$0x3] %vm1224, %v1223
    %s1227 = scalar_lea.vmem %s1, 120
    %1228 = vst.msk [vmem:[%s1227] sm:$0x3c] %vm1224, %v1223
    %s1229 = scalar_lea.vmem %s1, 56
    %1230 = vst.msk [vmem:[%s1229] sm:$0xc0] %vm1224, %v1223
    %s1231 = scalar_lea.vmem [#allocation0], 1139
    %s1232 = smov 3
    %v1233 = vld [vmem:[%s1231] ss:$8 sm:%s1232]
    %s1234 = scalar_lea.vmem [#allocation0], 931
    %v1235 = vld [vmem:[%s1234] ss:$8 sm:$0x3c]
    %vm1236 = vcmask 1045506
    %v1237 = vsel %vm1236, %v1235, %v1233
    %s1238 = scalar_lea.vmem [#allocation0], 723
    %s1239 = smov 192
    %v1240 = vld [vmem:[%s1238] ss:$8 sm:%s1239]
    %vm1241 = vcmask 1047558
    %v1242 = vsel %vm1241, %v1240, %v1237
    %1243 = vrot.lane.b32.xlu0 %v1242, 96
    %v1244 = vpop.permute.xlu0 %1243
    %vm1245 = vcmask 1048320
    %s1246 = scalar_lea.vmem %s1, 184
    %1247 = vst.msk [vmem:[%s1246] sm:$0x3] %vm1245, %v1244
    %s1248 = scalar_lea.vmem %s1, 152
    %1249 = vst.msk [vmem:[%s1248] sm:$0x3c] %vm1245, %v1244
    %s1250 = scalar_lea.vmem %s1, 120
    %1251 = vst.msk [vmem:[%s1250] sm:$0xc0] %vm1245, %v1244
    %s1252 = scalar_lea.vmem [#allocation0], 979
    %s1253 = smov 3
    %v1254 = vld [vmem:[%s1252] ss:$8 sm:%s1253]
    %1255 = vrot.lane.b32.xlu0 %v1254, 96
    %v1256 = vpop.permute.xlu0 %1255
    %vm1257 = vcmask 1048320
    %s1258 = scalar_lea.vmem %s1, 158
    %1259 = vst.msk [vmem:[%s1258] sm:$0x3] %vm1257, %v1256
    %s1260 = scalar_lea.vmem [#allocation0], 2
    %v1261 = vld [vmem:[%s1260] ss:$8 sm:$0xf]
    %s1262 = scalar_lea.vmem [#allocation0], 2
    %v1263 = vld [vmem:[%s1262] ss:$8 sm:$0xf0]
    %vm1264 = vcmask 1047556
    %v1265 = vsel %vm1264, %v1263, %v1261
    %1266 = vrot.lane.b32.xlu0 %v1265, 64
    %v1267 = vpop.permute.xlu0 %1266
    %vm1268 = vcmask 785920
    %1269 = vst.msk [vmem:[%s1] sm:$0xff] %vm1268, %v1267
    %s1270 = scalar_lea.vmem [#allocation0], 210
    %v1271 = vld [vmem:[%s1270] ss:$8 sm:$0xf]
    %s1272 = scalar_lea.vmem [#allocation0], 210
    %v1273 = vld [vmem:[%s1272] ss:$8 sm:$0xf0]
    %vm1274 = vcmask 1047556
    %v1275 = vsel %vm1274, %v1273, %v1271
    %1276 = vrot.lane.b32.xlu0 %v1275, 64
    %v1277 = vpop.permute.xlu0 %1276
    %vm1278 = vcmask 785920
    %s1279 = scalar_lea.vmem %s1, 32
    %1280 = vst.msk [vmem:[%s1279] sm:$0xff] %vm1278, %v1277
    %s1281 = scalar_lea.vmem [#allocation0], 418
    %s1282 = smov 3
    %v1283 = vld [vmem:[%s1281] ss:$8 sm:%s1282]
    %s1284 = scalar_lea.vmem [#allocation0], 578
    %v1285 = vld [vmem:[%s1284] ss:$8 sm:$0x3c]
    %vm1286 = vcmask 1045506
    %v1287 = vsel %vm1286, %v1285, %v1283
    %s1288 = scalar_lea.vmem [#allocation0], 578
    %s1289 = smov 192
    %v1290 = vld [vmem:[%s1288] ss:$8 sm:%s1289]
    %vm1291 = vcmask 1047558
    %v1292 = vsel %vm1291, %v1290, %v1287
    %1293 = vrot.lane.b32.xlu0 %v1292, 64
    %v1294 = vpop.permute.xlu0 %1293
    %vm1295 = vcmask 785920
    %s1296 = scalar_lea.vmem %s1, 64
    %1297 = vst.msk [vmem:[%s1296] sm:$0x3] %vm1295, %v1294
    %s1298 = scalar_lea.vmem %s1, 96
    %1299 = vst.msk [vmem:[%s1298] sm:$0xfc] %vm1295, %v1294
    %s1300 = scalar_lea.vmem [#allocation0], 578
    %s1301 = smov 3
    %v1302 = vld [vmem:[%s1300] ss:$8 sm:%s1301]
    %s1303 = scalar_lea.vmem [#allocation0], 786
    %v1304 = vld [vmem:[%s1303] ss:$8 sm:$0x3c]
    %vm1305 = vcmask 1045506
    %v1306 = vsel %vm1305, %v1304, %v1302
    %s1307 = scalar_lea.vmem [#allocation0], 786
    %s1308 = smov 192
    %v1309 = vld [vmem:[%s1307] ss:$8 sm:%s1308]
    %vm1310 = vcmask 1047558
    %v1311 = vsel %vm1310, %v1309, %v1306
    %1312 = vrot.lane.b32.xlu0 %v1311, 64
    %v1313 = vpop.permute.xlu0 %1312
    %vm1314 = vcmask 785920
    %s1315 = scalar_lea.vmem %s1, 96
    %1316 = vst.msk [vmem:[%s1315] sm:$0x3] %vm1314, %v1313
    %s1317 = scalar_lea.vmem %s1, 128
    %1318 = vst.msk [vmem:[%s1317] sm:$0xfc] %vm1314, %v1313
    %s1319 = scalar_lea.vmem [#allocation0], 786
    %s1320 = smov 3
    %v1321 = vld [vmem:[%s1319] ss:$8 sm:%s1320]
    %s1322 = scalar_lea.vmem [#allocation0], 1154
    %v1323 = vld [vmem:[%s1322] ss:$8 sm:$0x3c]
    %vm1324 = vcmask 1045506
    %v1325 = vsel %vm1324, %v1323, %v1321
    %s1326 = scalar_lea.vmem [#allocation0], 1154
    %s1327 = smov 192
    %v1328 = vld [vmem:[%s1326] ss:$8 sm:%s1327]
    %vm1329 = vcmask 1047558
    %v1330 = vsel %vm1329, %v1328, %v1325
    %1331 = vrot.lane.b32.xlu0 %v1330, 64
    %v1332 = vpop.permute.xlu0 %1331
    %vm1333 = vcmask 785920
    %s1334 = scalar_lea.vmem %s1, 128
    %1335 = vst.msk [vmem:[%s1334] sm:$0x3] %vm1333, %v1332
    %s1336 = scalar_lea.vmem %s1, 192
    %1337 = vst.msk [vmem:[%s1336] sm:$0xfc] %vm1333, %v1332
    %s1338 = scalar_lea.vmem [#allocation0], 994
    %s1339 = smov 3
    %v1340 = vld [vmem:[%s1338] ss:$8 sm:%s1339]
    %s1341 = scalar_lea.vmem [#allocation0], 50
    %v1342 = vld [vmem:[%s1341] ss:$8 sm:$0x3c]
    %vm1343 = vcmask 1045506
    %v1344 = vsel %vm1343, %v1342, %v1340
    %s1345 = scalar_lea.vmem [#allocation0], 50
    %s1346 = smov 192
    %v1347 = vld [vmem:[%s1345] ss:$8 sm:%s1346]
    %vm1348 = vcmask 1047558
    %v1349 = vsel %vm1348, %v1347, %v1344
    %1350 = vrot.lane.b32.xlu0 %v1349, 64
    %v1351 = vpop.permute.xlu0 %1350
    %vm1352 = vcmask 785920
    %s1353 = scalar_lea.vmem %s1, 160
    %1354 = vst.msk [vmem:[%s1353] sm:$0x3] %vm1352, %v1351
    %s1355 = scalar_lea.vmem %s1, 6
    %1356 = vst.msk [vmem:[%s1355] sm:$0xfc] %vm1352, %v1351
    %s1357 = scalar_lea.vmem [#allocation0], 1154
    %s1358 = smov 3
    %v1359 = vld [vmem:[%s1357] ss:$8 sm:%s1358]
    %s1360 = scalar_lea.vmem [#allocation0], 258
    %s1361 = smov 12
    %v1362 = vld [vmem:[%s1360] ss:$8 sm:%s1361]
    %vm1363 = vcmask 1043458
    %v1364 = vsel %vm1363, %v1362, %v1359
    %s1365 = scalar_lea.vmem [#allocation0], 418
    %v1366 = vld [vmem:[%s1365] ss:$8 sm:$0xf0]
    %vm1367 = vcmask 1047556
    %v1368 = vsel %vm1367, %v1366, %v1364
    %1369 = vrot.lane.b32.xlu0 %v1368, 64
    %v1370 = vpop.permute.xlu0 %1369
    %vm1371 = vcmask 785920
    %s1372 = scalar_lea.vmem %s1, 192
    %1373 = vst.msk [vmem:[%s1372] sm:$0x3] %vm1371, %v1370
    %s1374 = scalar_lea.vmem %s1, 38
    %1375 = vst.msk [vmem:[%s1374] sm:$0xc] %vm1371, %v1370
    %s1376 = scalar_lea.vmem %s1, 70
    %1377 = vst.msk [vmem:[%s1376] sm:$0xf0] %vm1371, %v1370
    %s1378 = scalar_lea.vmem [#allocation0], 434
    %s1379 = smov 3
    %v1380 = vld [vmem:[%s1378] ss:$8 sm:%s1379]
    %s1381 = scalar_lea.vmem [#allocation0], 642
    %v1382 = vld [vmem:[%s1381] ss:$8 sm:$0x3c]
    %vm1383 = vcmask 1045506
    %v1384 = vsel %vm1383, %v1382, %v1380
    %s1385 = scalar_lea.vmem [#allocation0], 66
    %s1386 = smov 192
    %v1387 = vld [vmem:[%s1385] ss:$8 sm:%s1386]
    %vm1388 = vcmask 1047558
    %v1389 = vsel %vm1388, %v1387, %v1384
    %1390 = vrot.lane.b32.xlu0 %v1389, 64
    %v1391 = vpop.permute.xlu0 %1390
    %vm1392 = vcmask 785920
    %s1393 = scalar_lea.vmem %s1, 72
    %1394 = vst.msk [vmem:[%s1393] sm:$0x3] %vm1392, %v1391
    %s1395 = scalar_lea.vmem %s1, 104
    %1396 = vst.msk [vmem:[%s1395] sm:$0x3c] %vm1392, %v1391
    %s1397 = scalar_lea.vmem %s1, 8
    %1398 = vst.msk [vmem:[%s1397] sm:$0xc0] %vm1392, %v1391
    %s1399 = scalar_lea.vmem [#allocation0], 642
    %s1400 = smov 3
    %v1401 = vld [vmem:[%s1399] ss:$8 sm:%s1400]
    %s1402 = scalar_lea.vmem [#allocation0], 1010
    %v1403 = vld [vmem:[%s1402] ss:$8 sm:$0x3c]
    %vm1404 = vcmask 1045506
    %v1405 = vsel %vm1404, %v1403, %v1401
    %s1406 = scalar_lea.vmem [#allocation0], 434
    %s1407 = smov 192
    %v1408 = vld [vmem:[%s1406] ss:$8 sm:%s1407]
    %vm1409 = vcmask 1047558
    %v1410 = vsel %vm1409, %v1408, %v1405
    %1411 = vrot.lane.b32.xlu0 %v1410, 64
    %v1412 = vpop.permute.xlu0 %1411
    %vm1413 = vcmask 785920
    %s1414 = scalar_lea.vmem %s1, 104
    %1415 = vst.msk [vmem:[%s1414] sm:$0x3] %vm1413, %v1412
    %s1416 = scalar_lea.vmem %s1, 168
    %1417 = vst.msk [vmem:[%s1416] sm:$0x3c] %vm1413, %v1412
    %s1418 = scalar_lea.vmem %s1, 72
    %1419 = vst.msk [vmem:[%s1418] sm:$0xc0] %vm1413, %v1412
    %s1420 = scalar_lea.vmem [#allocation0], 850
    %s1421 = smov 3
    %v1422 = vld [vmem:[%s1420] ss:$8 sm:%s1421]
    %s1423 = scalar_lea.vmem [#allocation0], 1218
    %v1424 = vld [vmem:[%s1423] ss:$8 sm:$0x3c]
    %vm1425 = vcmask 1045506
    %v1426 = vsel %vm1425, %v1424, %v1422
    %s1427 = scalar_lea.vmem [#allocation0], 642
    %s1428 = smov 192
    %v1429 = vld [vmem:[%s1427] ss:$8 sm:%s1428]
    %vm1430 = vcmask 1047558
    %v1431 = vsel %vm1430, %v1429, %v1426
    %1432 = vrot.lane.b32.xlu0 %v1431, 64
    %v1433 = vpop.permute.xlu0 %1432
    %vm1434 = vcmask 785920
    %s1435 = scalar_lea.vmem %s1, 136
    %1436 = vst.msk [vmem:[%s1435] sm:$0x3] %vm1434, %v1433
    %s1437 = scalar_lea.vmem %s1, 200
    %1438 = vst.msk [vmem:[%s1437] sm:$0x3c] %vm1434, %v1433
    %s1439 = scalar_lea.vmem %s1, 104
    %1440 = vst.msk [vmem:[%s1439] sm:$0xc0] %vm1434, %v1433
    %s1441 = scalar_lea.vmem [#allocation0], 1010
    %s1442 = smov 3
    %v1443 = vld [vmem:[%s1441] ss:$8 sm:%s1442]
    %s1444 = scalar_lea.vmem [#allocation0], 1042
    %s1445 = smov 12
    %v1446 = vld [vmem:[%s1444] ss:$8 sm:%s1445]
    %vm1447 = vcmask 1043458
    %v1448 = vsel %vm1447, %v1446, %v1443
    %s1449 = scalar_lea.vmem [#allocation0], 98
    %s1450 = smov 48
    %v1451 = vld [vmem:[%s1449] ss:$8 sm:%s1450]
    %vm1452 = vcmask 1045508
    %v1453 = vsel %vm1452, %v1451, %v1448
    %s1454 = scalar_lea.vmem [#allocation0], 258
    %s1455 = smov 192
    %v1456 = vld [vmem:[%s1454] ss:$8 sm:%s1455]
    %vm1457 = vcmask 1047558
    %v1458 = vsel %vm1457, %v1456, %v1453
    %1459 = vrot.lane.b32.xlu0 %v1458, 64
    %v1460 = vpop.permute.xlu0 %1459
    %vm1461 = vcmask 785920
    %s1462 = scalar_lea.vmem %s1, 168
    %1463 = vst.msk [vmem:[%s1462] sm:$0x3] %vm1461, %v1460
    %s1464 = scalar_lea.vmem %s1, 172
    %1465 = vst.msk [vmem:[%s1464] sm:$0xc] %vm1461, %v1460
    %s1466 = scalar_lea.vmem %s1, 12
    %1467 = vst.msk [vmem:[%s1466] sm:$0x30] %vm1461, %v1460
    %s1468 = scalar_lea.vmem %s1, 44
    %1469 = vst.msk [vmem:[%s1468] sm:$0xc0] %vm1461, %v1460
    %s1470 = scalar_lea.vmem [#allocation0], 1218
    %s1471 = smov 3
    %v1472 = vld [vmem:[%s1470] ss:$8 sm:%s1471]
    %s1473 = scalar_lea.vmem [#allocation0], 1250
    %s1474 = smov 12
    %v1475 = vld [vmem:[%s1473] ss:$8 sm:%s1474]
    %vm1476 = vcmask 1043458
    %v1477 = vsel %vm1476, %v1475, %v1472
    %s1478 = scalar_lea.vmem [#allocation0], 258
    %s1479 = smov 48
    %v1480 = vld [vmem:[%s1478] ss:$8 sm:%s1479]
    %vm1481 = vcmask 1045508
    %v1482 = vsel %vm1481, %v1480, %v1477
    %s1483 = scalar_lea.vmem [#allocation0], 466
    %s1484 = smov 192
    %v1485 = vld [vmem:[%s1483] ss:$8 sm:%s1484]
    %vm1486 = vcmask 1047558
    %v1487 = vsel %vm1486, %v1485, %v1482
    %1488 = vrot.lane.b32.xlu0 %v1487, 64
    %v1489 = vpop.permute.xlu0 %1488
    %vm1490 = vcmask 785920
    %s1491 = scalar_lea.vmem %s1, 200
    %1492 = vst.msk [vmem:[%s1491] sm:$0x3] %vm1490, %v1489
    %s1493 = scalar_lea.vmem %s1, 204
    %1494 = vst.msk [vmem:[%s1493] sm:$0xc] %vm1490, %v1489
    %s1495 = scalar_lea.vmem %s1, 44
    %1496 = vst.msk [vmem:[%s1495] sm:$0x30] %vm1490, %v1489
    %s1497 = scalar_lea.vmem %s1, 76
    %1498 = vst.msk [vmem:[%s1497] sm:$0xc0] %vm1490, %v1489
    %s1499 = scalar_lea.vmem [#allocation0], 498
    %s1500 = smov 3
    %v1501 = vld [vmem:[%s1499] ss:$8 sm:%s1500]
    %s1502 = scalar_lea.vmem [#allocation0], 866
    %s1503 = smov 12
    %v1504 = vld [vmem:[%s1502] ss:$8 sm:%s1503]
    %vm1505 = vcmask 1043458
    %v1506 = vsel %vm1505, %v1504, %v1501
    %s1507 = scalar_lea.vmem [#allocation0], 290
    %v1508 = vld [vmem:[%s1507] ss:$8 sm:$0xf0]
    %vm1509 = vcmask 1047556
    %v1510 = vsel %vm1509, %v1508, %v1506
    %1511 = vrot.lane.b32.xlu0 %v1510, 64
    %v1512 = vpop.permute.xlu0 %1511
    %vm1513 = vcmask 785920
    %s1514 = scalar_lea.vmem %s1, 80
    %1515 = vst.msk [vmem:[%s1514] sm:$0x3] %vm1513, %v1512
    %s1516 = scalar_lea.vmem %s1, 144
    %1517 = vst.msk [vmem:[%s1516] sm:$0xc] %vm1513, %v1512
    %s1518 = scalar_lea.vmem %s1, 48
    %1519 = vst.msk [vmem:[%s1518] sm:$0xf0] %vm1513, %v1512
    %s1520 = scalar_lea.vmem [#allocation0], 706
    %s1521 = smov 3
    %v1522 = vld [vmem:[%s1520] ss:$8 sm:%s1521]
    %s1523 = scalar_lea.vmem [#allocation0], 1074
    %s1524 = smov 12
    %v1525 = vld [vmem:[%s1523] ss:$8 sm:%s1524]
    %vm1526 = vcmask 1043458
    %v1527 = vsel %vm1526, %v1525, %v1522
    %s1528 = scalar_lea.vmem [#allocation0], 498
    %v1529 = vld [vmem:[%s1528] ss:$8 sm:$0xf0]
    %vm1530 = vcmask 1047556
    %v1531 = vsel %vm1530, %v1529, %v1527
    %1532 = vrot.lane.b32.xlu0 %v1531, 64
    %v1533 = vpop.permute.xlu0 %1532
    %vm1534 = vcmask 785920
    %s1535 = scalar_lea.vmem %s1, 112
    %1536 = vst.msk [vmem:[%s1535] sm:$0x3] %vm1534, %v1533
    %s1537 = scalar_lea.vmem %s1, 176
    %1538 = vst.msk [vmem:[%s1537] sm:$0xc] %vm1534, %v1533
    %s1539 = scalar_lea.vmem %s1, 80
    %1540 = vst.msk [vmem:[%s1539] sm:$0xf0] %vm1534, %v1533
    %s1541 = scalar_lea.vmem [#allocation0], 866
    %s1542 = smov 3
    %v1543 = vld [vmem:[%s1541] ss:$8 sm:%s1542]
    %s1544 = scalar_lea.vmem [#allocation0], 882
    %v1545 = vld [vmem:[%s1544] ss:$8 sm:$0x3c]
    %vm1546 = vcmask 1045506
    %v1547 = vsel %vm1546, %v1545, %v1543
    %s1548 = scalar_lea.vmem [#allocation0], 98
    %s1549 = smov 192
    %v1550 = vld [vmem:[%s1548] ss:$8 sm:%s1549]
    %vm1551 = vcmask 1047558
    %v1552 = vsel %vm1551, %v1550, %v1547
    %1553 = vrot.lane.b32.xlu0 %v1552, 64
    %v1554 = vpop.permute.xlu0 %1553
    %vm1555 = vcmask 785920
    %s1556 = scalar_lea.vmem %s1, 144
    %1557 = vst.msk [vmem:[%s1556] sm:$0x3] %vm1555, %v1554
    %s1558 = scalar_lea.vmem %s1, 146
    %1559 = vst.msk [vmem:[%s1558] sm:$0x3c] %vm1555, %v1554
    %s1560 = scalar_lea.vmem %s1, 18
    %1561 = vst.msk [vmem:[%s1560] sm:$0xc0] %vm1555, %v1554
    %s1562 = scalar_lea.vmem [#allocation0], 1074
    %s1563 = smov 3
    %v1564 = vld [vmem:[%s1562] ss:$8 sm:%s1563]
    %s1565 = scalar_lea.vmem [#allocation0], 1090
    %v1566 = vld [vmem:[%s1565] ss:$8 sm:$0x3c]
    %vm1567 = vcmask 1045506
    %v1568 = vsel %vm1567, %v1566, %v1564
    %s1569 = scalar_lea.vmem [#allocation0], 306
    %s1570 = smov 192
    %v1571 = vld [vmem:[%s1569] ss:$8 sm:%s1570]
    %vm1572 = vcmask 1047558
    %v1573 = vsel %vm1572, %v1571, %v1568
    %1574 = vrot.lane.b32.xlu0 %v1573, 64
    %v1575 = vpop.permute.xlu0 %1574
    %vm1576 = vcmask 785920
    %s1577 = scalar_lea.vmem %s1, 176
    %1578 = vst.msk [vmem:[%s1577] sm:$0x3] %vm1576, %v1575
    %s1579 = scalar_lea.vmem %s1, 178
    %1580 = vst.msk [vmem:[%s1579] sm:$0x3c] %vm1576, %v1575
    %s1581 = scalar_lea.vmem %s1, 50
    %1582 = vst.msk [vmem:[%s1581] sm:$0xc0] %vm1576, %v1575
    %s1583 = scalar_lea.vmem [#allocation0], 1282
    %s1584 = smov 3
    %v1585 = vld [vmem:[%s1583] ss:$8 sm:%s1584]
    %s1586 = scalar_lea.vmem [#allocation0], 546
    %s1587 = smov 12
    %v1588 = vld [vmem:[%s1586] ss:$8 sm:%s1587]
    %vm1589 = vcmask 1043458
    %v1590 = vsel %vm1589, %v1588, %v1585
    %s1591 = scalar_lea.vmem [#allocation0], 130
    %v1592 = vld [vmem:[%s1591] ss:$8 sm:$0xf0]
    %vm1593 = vcmask 1047556
    %v1594 = vsel %vm1593, %v1592, %v1590
    %1595 = vrot.lane.b32.xlu0 %v1594, 64
    %v1596 = vpop.permute.xlu0 %1595
    %vm1597 = vcmask 785920
    %s1598 = scalar_lea.vmem %s1, 208
    %1599 = vst.msk [vmem:[%s1598] sm:$0x3] %vm1597, %v1596
    %s1600 = scalar_lea.vmem %s1, 86
    %1601 = vst.msk [vmem:[%s1600] sm:$0xc] %vm1597, %v1596
    %s1602 = scalar_lea.vmem %s1, 22
    %1603 = vst.msk [vmem:[%s1602] sm:$0xf0] %vm1597, %v1596
    %s1604 = scalar_lea.vmem [#allocation0], 722
    %s1605 = smov 3
    %v1606 = vld [vmem:[%s1604] ss:$8 sm:%s1605]
    %s1607 = scalar_lea.vmem [#allocation0], 354
    %v1608 = vld [vmem:[%s1607] ss:$8 sm:$0x3c]
    %vm1609 = vcmask 1045506
    %v1610 = vsel %vm1609, %v1608, %v1606
    %s1611 = scalar_lea.vmem [#allocation0], 146
    %s1612 = smov 192
    %v1613 = vld [vmem:[%s1611] ss:$8 sm:%s1612]
    %vm1614 = vcmask 1047558
    %v1615 = vsel %vm1614, %v1613, %v1610
    %1616 = vrot.lane.b32.xlu0 %v1615, 64
    %v1617 = vpop.permute.xlu0 %1616
    %vm1618 = vcmask 785920
    %s1619 = scalar_lea.vmem %s1, 120
    %1620 = vst.msk [vmem:[%s1619] sm:$0x3] %vm1618, %v1617
    %s1621 = scalar_lea.vmem %s1, 56
    %1622 = vst.msk [vmem:[%s1621] sm:$0x3c] %vm1618, %v1617
    %s1623 = scalar_lea.vmem %s1, 24
    %1624 = vst.msk [vmem:[%s1623] sm:$0xc0] %vm1618, %v1617
    %s1625 = scalar_lea.vmem [#allocation0], 930
    %s1626 = smov 3
    %v1627 = vld [vmem:[%s1625] ss:$8 sm:%s1626]
    %s1628 = scalar_lea.vmem [#allocation0], 722
    %v1629 = vld [vmem:[%s1628] ss:$8 sm:$0x3c]
    %vm1630 = vcmask 1045506
    %v1631 = vsel %vm1630, %v1629, %v1627
    %s1632 = scalar_lea.vmem [#allocation0], 354
    %s1633 = smov 192
    %v1634 = vld [vmem:[%s1632] ss:$8 sm:%s1633]
    %vm1635 = vcmask 1047558
    %v1636 = vsel %vm1635, %v1634, %v1631
    %1637 = vrot.lane.b32.xlu0 %v1636, 64
    %v1638 = vpop.permute.xlu0 %1637
    %vm1639 = vcmask 785920
    %s1640 = scalar_lea.vmem %s1, 152
    %1641 = vst.msk [vmem:[%s1640] sm:$0x3] %vm1639, %v1638
    %s1642 = scalar_lea.vmem %s1, 120
    %1643 = vst.msk [vmem:[%s1642] sm:$0x3c] %vm1639, %v1638
    %s1644 = scalar_lea.vmem %s1, 56
    %1645 = vst.msk [vmem:[%s1644] sm:$0xc0] %vm1639, %v1638
    %s1646 = scalar_lea.vmem [#allocation0], 1138
    %s1647 = smov 3
    %v1648 = vld [vmem:[%s1646] ss:$8 sm:%s1647]
    %s1649 = scalar_lea.vmem [#allocation0], 930
    %v1650 = vld [vmem:[%s1649] ss:$8 sm:$0x3c]
    %vm1651 = vcmask 1045506
    %v1652 = vsel %vm1651, %v1650, %v1648
    %s1653 = scalar_lea.vmem [#allocation0], 722
    %s1654 = smov 192
    %v1655 = vld [vmem:[%s1653] ss:$8 sm:%s1654]
    %vm1656 = vcmask 1047558
    %v1657 = vsel %vm1656, %v1655, %v1652
    %1658 = vrot.lane.b32.xlu0 %v1657, 64
    %v1659 = vpop.permute.xlu0 %1658
    %vm1660 = vcmask 785920
    %s1661 = scalar_lea.vmem %s1, 184
    %1662 = vst.msk [vmem:[%s1661] sm:$0x3] %vm1660, %v1659
    %s1663 = scalar_lea.vmem %s1, 152
    %1664 = vst.msk [vmem:[%s1663] sm:$0x3c] %vm1660, %v1659
    %s1665 = scalar_lea.vmem %s1, 120
    %1666 = vst.msk [vmem:[%s1665] sm:$0xc0] %vm1660, %v1659
    %s1667 = scalar_lea.vmem [#allocation0], 978
    %s1668 = smov 3
    %v1669 = vld [vmem:[%s1667] ss:$8 sm:%s1668]
    %1670 = vrot.lane.b32.xlu0 %v1669, 64
    %v1671 = vpop.permute.xlu0 %1670
    %vm1672 = vcmask 785920
    %s1673 = scalar_lea.vmem %s1, 158
    %1674 = vst.msk [vmem:[%s1673] sm:$0x3] %vm1672, %v1671
    %s1675 = scalar_lea.vmem [#allocation0], 1
    %v1676 = vld [vmem:[%s1675] ss:$8 sm:$0xf]
    %s1677 = scalar_lea.vmem [#allocation0], 1
    %v1678 = vld [vmem:[%s1677] ss:$8 sm:$0xf0]
    %vm1679 = vcmask 1047556
    %v1680 = vsel %vm1679, %v1678, %v1676
    %1681 = vrot.lane.b32.xlu0 %v1680, 32
    %v1682 = vpop.permute.xlu0 %1681
    %vm1683 = vcmask 523520
    %1684 = vst.msk [vmem:[%s1] sm:$0xff] %vm1683, %v1682
    %s1685 = scalar_lea.vmem [#allocation0], 209
    %v1686 = vld [vmem:[%s1685] ss:$8 sm:$0xf]
    %s1687 = scalar_lea.vmem [#allocation0], 209
    %v1688 = vld [vmem:[%s1687] ss:$8 sm:$0xf0]
    %vm1689 = vcmask 1047556
    %v1690 = vsel %vm1689, %v1688, %v1686
    %1691 = vrot.lane.b32.xlu0 %v1690, 32
    %v1692 = vpop.permute.xlu0 %1691
    %vm1693 = vcmask 523520
    %s1694 = scalar_lea.vmem %s1, 32
    %1695 = vst.msk [vmem:[%s1694] sm:$0xff] %vm1693, %v1692
    %s1696 = scalar_lea.vmem [#allocation0], 417
    %s1697 = smov 3
    %v1698 = vld [vmem:[%s1696] ss:$8 sm:%s1697]
    %s1699 = scalar_lea.vmem [#allocation0], 577
    %v1700 = vld [vmem:[%s1699] ss:$8 sm:$0x3c]
    %vm1701 = vcmask 1045506
    %v1702 = vsel %vm1701, %v1700, %v1698
    %s1703 = scalar_lea.vmem [#allocation0], 577
    %s1704 = smov 192
    %v1705 = vld [vmem:[%s1703] ss:$8 sm:%s1704]
    %vm1706 = vcmask 1047558
    %v1707 = vsel %vm1706, %v1705, %v1702
    %1708 = vrot.lane.b32.xlu0 %v1707, 32
    %v1709 = vpop.permute.xlu0 %1708
    %vm1710 = vcmask 523520
    %s1711 = scalar_lea.vmem %s1, 64
    %1712 = vst.msk [vmem:[%s1711] sm:$0x3] %vm1710, %v1709
    %s1713 = scalar_lea.vmem %s1, 96
    %1714 = vst.msk [vmem:[%s1713] sm:$0xfc] %vm1710, %v1709
    %s1715 = scalar_lea.vmem [#allocation0], 577
    %s1716 = smov 3
    %v1717 = vld [vmem:[%s1715] ss:$8 sm:%s1716]
    %s1718 = scalar_lea.vmem [#allocation0], 785
    %v1719 = vld [vmem:[%s1718] ss:$8 sm:$0x3c]
    %vm1720 = vcmask 1045506
    %v1721 = vsel %vm1720, %v1719, %v1717
    %s1722 = scalar_lea.vmem [#allocation0], 785
    %s1723 = smov 192
    %v1724 = vld [vmem:[%s1722] ss:$8 sm:%s1723]
    %vm1725 = vcmask 1047558
    %v1726 = vsel %vm1725, %v1724, %v1721
    %1727 = vrot.lane.b32.xlu0 %v1726, 32
    %v1728 = vpop.permute.xlu0 %1727
    %vm1729 = vcmask 523520
    %s1730 = scalar_lea.vmem %s1, 96
    %1731 = vst.msk [vmem:[%s1730] sm:$0x3] %vm1729, %v1728
    %s1732 = scalar_lea.vmem %s1, 128
    %1733 = vst.msk [vmem:[%s1732] sm:$0xfc] %vm1729, %v1728
    %s1734 = scalar_lea.vmem [#allocation0], 785
    %s1735 = smov 3
    %v1736 = vld [vmem:[%s1734] ss:$8 sm:%s1735]
    %s1737 = scalar_lea.vmem [#allocation0], 1153
    %v1738 = vld [vmem:[%s1737] ss:$8 sm:$0x3c]
    %vm1739 = vcmask 1045506
    %v1740 = vsel %vm1739, %v1738, %v1736
    %s1741 = scalar_lea.vmem [#allocation0], 1153
    %s1742 = smov 192
    %v1743 = vld [vmem:[%s1741] ss:$8 sm:%s1742]
    %vm1744 = vcmask 1047558
    %v1745 = vsel %vm1744, %v1743, %v1740
    %1746 = vrot.lane.b32.xlu0 %v1745, 32
    %v1747 = vpop.permute.xlu0 %1746
    %vm1748 = vcmask 523520
    %s1749 = scalar_lea.vmem %s1, 128
    %1750 = vst.msk [vmem:[%s1749] sm:$0x3] %vm1748, %v1747
    %s1751 = scalar_lea.vmem %s1, 192
    %1752 = vst.msk [vmem:[%s1751] sm:$0xfc] %vm1748, %v1747
    %s1753 = scalar_lea.vmem [#allocation0], 993
    %s1754 = smov 3
    %v1755 = vld [vmem:[%s1753] ss:$8 sm:%s1754]
    %s1756 = scalar_lea.vmem [#allocation0], 49
    %v1757 = vld [vmem:[%s1756] ss:$8 sm:$0x3c]
    %vm1758 = vcmask 1045506
    %v1759 = vsel %vm1758, %v1757, %v1755
    %s1760 = scalar_lea.vmem [#allocation0], 49
    %s1761 = smov 192
    %v1762 = vld [vmem:[%s1760] ss:$8 sm:%s1761]
    %vm1763 = vcmask 1047558
    %v1764 = vsel %vm1763, %v1762, %v1759
    %1765 = vrot.lane.b32.xlu0 %v1764, 32
    %v1766 = vpop.permute.xlu0 %1765
    %vm1767 = vcmask 523520
    %s1768 = scalar_lea.vmem %s1, 160
    %1769 = vst.msk [vmem:[%s1768] sm:$0x3] %vm1767, %v1766
    %s1770 = scalar_lea.vmem %s1, 6
    %1771 = vst.msk [vmem:[%s1770] sm:$0xfc] %vm1767, %v1766
    %s1772 = scalar_lea.vmem [#allocation0], 1153
    %s1773 = smov 3
    %v1774 = vld [vmem:[%s1772] ss:$8 sm:%s1773]
    %s1775 = scalar_lea.vmem [#allocation0], 257
    %s1776 = smov 12
    %v1777 = vld [vmem:[%s1775] ss:$8 sm:%s1776]
    %vm1778 = vcmask 1043458
    %v1779 = vsel %vm1778, %v1777, %v1774
    %s1780 = scalar_lea.vmem [#allocation0], 417
    %v1781 = vld [vmem:[%s1780] ss:$8 sm:$0xf0]
    %vm1782 = vcmask 1047556
    %v1783 = vsel %vm1782, %v1781, %v1779
    %1784 = vrot.lane.b32.xlu0 %v1783, 32
    %v1785 = vpop.permute.xlu0 %1784
    %vm1786 = vcmask 523520
    %s1787 = scalar_lea.vmem %s1, 192
    %1788 = vst.msk [vmem:[%s1787] sm:$0x3] %vm1786, %v1785
    %s1789 = scalar_lea.vmem %s1, 38
    %1790 = vst.msk [vmem:[%s1789] sm:$0xc] %vm1786, %v1785
    %s1791 = scalar_lea.vmem %s1, 70
    %1792 = vst.msk [vmem:[%s1791] sm:$0xf0] %vm1786, %v1785
    %s1793 = scalar_lea.vmem [#allocation0], 433
    %s1794 = smov 3
    %v1795 = vld [vmem:[%s1793] ss:$8 sm:%s1794]
    %s1796 = scalar_lea.vmem [#allocation0], 641
    %v1797 = vld [vmem:[%s1796] ss:$8 sm:$0x3c]
    %vm1798 = vcmask 1045506
    %v1799 = vsel %vm1798, %v1797, %v1795
    %s1800 = scalar_lea.vmem [#allocation0], 65
    %s1801 = smov 192
    %v1802 = vld [vmem:[%s1800] ss:$8 sm:%s1801]
    %vm1803 = vcmask 1047558
    %v1804 = vsel %vm1803, %v1802, %v1799
    %1805 = vrot.lane.b32.xlu0 %v1804, 32
    %v1806 = vpop.permute.xlu0 %1805
    %vm1807 = vcmask 523520
    %s1808 = scalar_lea.vmem %s1, 72
    %1809 = vst.msk [vmem:[%s1808] sm:$0x3] %vm1807, %v1806
    %s1810 = scalar_lea.vmem %s1, 104
    %1811 = vst.msk [vmem:[%s1810] sm:$0x3c] %vm1807, %v1806
    %s1812 = scalar_lea.vmem %s1, 8
    %1813 = vst.msk [vmem:[%s1812] sm:$0xc0] %vm1807, %v1806
    %s1814 = scalar_lea.vmem [#allocation0], 641
    %s1815 = smov 3
    %v1816 = vld [vmem:[%s1814] ss:$8 sm:%s1815]
    %s1817 = scalar_lea.vmem [#allocation0], 1009
    %v1818 = vld [vmem:[%s1817] ss:$8 sm:$0x3c]
    %vm1819 = vcmask 1045506
    %v1820 = vsel %vm1819, %v1818, %v1816
    %s1821 = scalar_lea.vmem [#allocation0], 433
    %s1822 = smov 192
    %v1823 = vld [vmem:[%s1821] ss:$8 sm:%s1822]
    %vm1824 = vcmask 1047558
    %v1825 = vsel %vm1824, %v1823, %v1820
    %1826 = vrot.lane.b32.xlu0 %v1825, 32
    %v1827 = vpop.permute.xlu0 %1826
    %vm1828 = vcmask 523520
    %s1829 = scalar_lea.vmem %s1, 104
    %1830 = vst.msk [vmem:[%s1829] sm:$0x3] %vm1828, %v1827
    %s1831 = scalar_lea.vmem %s1, 168
    %1832 = vst.msk [vmem:[%s1831] sm:$0x3c] %vm1828, %v1827
    %s1833 = scalar_lea.vmem %s1, 72
    %1834 = vst.msk [vmem:[%s1833] sm:$0xc0] %vm1828, %v1827
    %s1835 = scalar_lea.vmem [#allocation0], 849
    %s1836 = smov 3
    %v1837 = vld [vmem:[%s1835] ss:$8 sm:%s1836]
    %s1838 = scalar_lea.vmem [#allocation0], 1217
    %v1839 = vld [vmem:[%s1838] ss:$8 sm:$0x3c]
    %vm1840 = vcmask 1045506
    %v1841 = vsel %vm1840, %v1839, %v1837
    %s1842 = scalar_lea.vmem [#allocation0], 641
    %s1843 = smov 192
    %v1844 = vld [vmem:[%s1842] ss:$8 sm:%s1843]
    %vm1845 = vcmask 1047558
    %v1846 = vsel %vm1845, %v1844, %v1841
    %1847 = vrot.lane.b32.xlu0 %v1846, 32
    %v1848 = vpop.permute.xlu0 %1847
    %vm1849 = vcmask 523520
    %s1850 = scalar_lea.vmem %s1, 136
    %1851 = vst.msk [vmem:[%s1850] sm:$0x3] %vm1849, %v1848
    %s1852 = scalar_lea.vmem %s1, 200
    %1853 = vst.msk [vmem:[%s1852] sm:$0x3c] %vm1849, %v1848
    %s1854 = scalar_lea.vmem %s1, 104
    %1855 = vst.msk [vmem:[%s1854] sm:$0xc0] %vm1849, %v1848
    %s1856 = scalar_lea.vmem [#allocation0], 1009
    %s1857 = smov 3
    %v1858 = vld [vmem:[%s1856] ss:$8 sm:%s1857]
    %s1859 = scalar_lea.vmem [#allocation0], 1041
    %s1860 = smov 12
    %v1861 = vld [vmem:[%s1859] ss:$8 sm:%s1860]
    %vm1862 = vcmask 1043458
    %v1863 = vsel %vm1862, %v1861, %v1858
    %s1864 = scalar_lea.vmem [#allocation0], 97
    %s1865 = smov 48
    %v1866 = vld [vmem:[%s1864] ss:$8 sm:%s1865]
    %vm1867 = vcmask 1045508
    %v1868 = vsel %vm1867, %v1866, %v1863
    %s1869 = scalar_lea.vmem [#allocation0], 257
    %s1870 = smov 192
    %v1871 = vld [vmem:[%s1869] ss:$8 sm:%s1870]
    %vm1872 = vcmask 1047558
    %v1873 = vsel %vm1872, %v1871, %v1868
    %1874 = vrot.lane.b32.xlu0 %v1873, 32
    %v1875 = vpop.permute.xlu0 %1874
    %vm1876 = vcmask 523520
    %s1877 = scalar_lea.vmem %s1, 168
    %1878 = vst.msk [vmem:[%s1877] sm:$0x3] %vm1876, %v1875
    %s1879 = scalar_lea.vmem %s1, 172
    %1880 = vst.msk [vmem:[%s1879] sm:$0xc] %vm1876, %v1875
    %s1881 = scalar_lea.vmem %s1, 12
    %1882 = vst.msk [vmem:[%s1881] sm:$0x30] %vm1876, %v1875
    %s1883 = scalar_lea.vmem %s1, 44
    %1884 = vst.msk [vmem:[%s1883] sm:$0xc0] %vm1876, %v1875
    %s1885 = scalar_lea.vmem [#allocation0], 1217
    %s1886 = smov 3
    %v1887 = vld [vmem:[%s1885] ss:$8 sm:%s1886]
    %s1888 = scalar_lea.vmem [#allocation0], 1249
    %s1889 = smov 12
    %v1890 = vld [vmem:[%s1888] ss:$8 sm:%s1889]
    %vm1891 = vcmask 1043458
    %v1892 = vsel %vm1891, %v1890, %v1887
    %s1893 = scalar_lea.vmem [#allocation0], 257
    %s1894 = smov 48
    %v1895 = vld [vmem:[%s1893] ss:$8 sm:%s1894]
    %vm1896 = vcmask 1045508
    %v1897 = vsel %vm1896, %v1895, %v1892
    %s1898 = scalar_lea.vmem [#allocation0], 465
    %s1899 = smov 192
    %v1900 = vld [vmem:[%s1898] ss:$8 sm:%s1899]
    %vm1901 = vcmask 1047558
    %v1902 = vsel %vm1901, %v1900, %v1897
    %1903 = vrot.lane.b32.xlu0 %v1902, 32
    %v1904 = vpop.permute.xlu0 %1903
    %vm1905 = vcmask 523520
    %s1906 = scalar_lea.vmem %s1, 200
    %1907 = vst.msk [vmem:[%s1906] sm:$0x3] %vm1905, %v1904
    %s1908 = scalar_lea.vmem %s1, 204
    %1909 = vst.msk [vmem:[%s1908] sm:$0xc] %vm1905, %v1904
    %s1910 = scalar_lea.vmem %s1, 44
    %1911 = vst.msk [vmem:[%s1910] sm:$0x30] %vm1905, %v1904
    %s1912 = scalar_lea.vmem %s1, 76
    %1913 = vst.msk [vmem:[%s1912] sm:$0xc0] %vm1905, %v1904
    %s1914 = scalar_lea.vmem [#allocation0], 497
    %s1915 = smov 3
    %v1916 = vld [vmem:[%s1914] ss:$8 sm:%s1915]
    %s1917 = scalar_lea.vmem [#allocation0], 865
    %s1918 = smov 12
    %v1919 = vld [vmem:[%s1917] ss:$8 sm:%s1918]
    %vm1920 = vcmask 1043458
    %v1921 = vsel %vm1920, %v1919, %v1916
    %s1922 = scalar_lea.vmem [#allocation0], 289
    %v1923 = vld [vmem:[%s1922] ss:$8 sm:$0xf0]
    %vm1924 = vcmask 1047556
    %v1925 = vsel %vm1924, %v1923, %v1921
    %1926 = vrot.lane.b32.xlu0 %v1925, 32
    %v1927 = vpop.permute.xlu0 %1926
    %vm1928 = vcmask 523520
    %s1929 = scalar_lea.vmem %s1, 80
    %1930 = vst.msk [vmem:[%s1929] sm:$0x3] %vm1928, %v1927
    %s1931 = scalar_lea.vmem %s1, 144
    %1932 = vst.msk [vmem:[%s1931] sm:$0xc] %vm1928, %v1927
    %s1933 = scalar_lea.vmem %s1, 48
    %1934 = vst.msk [vmem:[%s1933] sm:$0xf0] %vm1928, %v1927
    %s1935 = scalar_lea.vmem [#allocation0], 705
    %s1936 = smov 3
    %v1937 = vld [vmem:[%s1935] ss:$8 sm:%s1936]
    %s1938 = scalar_lea.vmem [#allocation0], 1073
    %s1939 = smov 12
    %v1940 = vld [vmem:[%s1938] ss:$8 sm:%s1939]
    %vm1941 = vcmask 1043458
    %v1942 = vsel %vm1941, %v1940, %v1937
    %s1943 = scalar_lea.vmem [#allocation0], 497
    %v1944 = vld [vmem:[%s1943] ss:$8 sm:$0xf0]
    %vm1945 = vcmask 1047556
    %v1946 = vsel %vm1945, %v1944, %v1942
    %1947 = vrot.lane.b32.xlu0 %v1946, 32
    %v1948 = vpop.permute.xlu0 %1947
    %vm1949 = vcmask 523520
    %s1950 = scalar_lea.vmem %s1, 112
    %1951 = vst.msk [vmem:[%s1950] sm:$0x3] %vm1949, %v1948
    %s1952 = scalar_lea.vmem %s1, 176
    %1953 = vst.msk [vmem:[%s1952] sm:$0xc] %vm1949, %v1948
    %s1954 = scalar_lea.vmem %s1, 80
    %1955 = vst.msk [vmem:[%s1954] sm:$0xf0] %vm1949, %v1948
    %s1956 = scalar_lea.vmem [#allocation0], 865
    %s1957 = smov 3
    %v1958 = vld [vmem:[%s1956] ss:$8 sm:%s1957]
    %s1959 = scalar_lea.vmem [#allocation0], 881
    %v1960 = vld [vmem:[%s1959] ss:$8 sm:$0x3c]
    %vm1961 = vcmask 1045506
    %v1962 = vsel %vm1961, %v1960, %v1958
    %s1963 = scalar_lea.vmem [#allocation0], 97
    %s1964 = smov 192
    %v1965 = vld [vmem:[%s1963] ss:$8 sm:%s1964]
    %vm1966 = vcmask 1047558
    %v1967 = vsel %vm1966, %v1965, %v1962
    %1968 = vrot.lane.b32.xlu0 %v1967, 32
    %v1969 = vpop.permute.xlu0 %1968
    %vm1970 = vcmask 523520
    %s1971 = scalar_lea.vmem %s1, 144
    %1972 = vst.msk [vmem:[%s1971] sm:$0x3] %vm1970, %v1969
    %s1973 = scalar_lea.vmem %s1, 146
    %1974 = vst.msk [vmem:[%s1973] sm:$0x3c] %vm1970, %v1969
    %s1975 = scalar_lea.vmem %s1, 18
    %1976 = vst.msk [vmem:[%s1975] sm:$0xc0] %vm1970, %v1969
    %s1977 = scalar_lea.vmem [#allocation0], 1073
    %s1978 = smov 3
    %v1979 = vld [vmem:[%s1977] ss:$8 sm:%s1978]
    %s1980 = scalar_lea.vmem [#allocation0], 1089
    %v1981 = vld [vmem:[%s1980] ss:$8 sm:$0x3c]
    %vm1982 = vcmask 1045506
    %v1983 = vsel %vm1982, %v1981, %v1979
    %s1984 = scalar_lea.vmem [#allocation0], 305
    %s1985 = smov 192
    %v1986 = vld [vmem:[%s1984] ss:$8 sm:%s1985]
    %vm1987 = vcmask 1047558
    %v1988 = vsel %vm1987, %v1986, %v1983
    %1989 = vrot.lane.b32.xlu0 %v1988, 32
    %v1990 = vpop.permute.xlu0 %1989
    %vm1991 = vcmask 523520
    %s1992 = scalar_lea.vmem %s1, 176
    %1993 = vst.msk [vmem:[%s1992] sm:$0x3] %vm1991, %v1990
    %s1994 = scalar_lea.vmem %s1, 178
    %1995 = vst.msk [vmem:[%s1994] sm:$0x3c] %vm1991, %v1990
    %s1996 = scalar_lea.vmem %s1, 50
    %1997 = vst.msk [vmem:[%s1996] sm:$0xc0] %vm1991, %v1990
    %s1998 = scalar_lea.vmem [#allocation0], 1281
    %s1999 = smov 3
    %v2000 = vld [vmem:[%s1998] ss:$8 sm:%s1999]
    %s2001 = scalar_lea.vmem [#allocation0], 545
    %s2002 = smov 12
    %v2003 = vld [vmem:[%s2001] ss:$8 sm:%s2002]
    %vm2004 = vcmask 1043458
    %v2005 = vsel %vm2004, %v2003, %v2000
    %s2006 = scalar_lea.vmem [#allocation0], 129
    %v2007 = vld [vmem:[%s2006] ss:$8 sm:$0xf0]
    %vm2008 = vcmask 1047556
    %v2009 = vsel %vm2008, %v2007, %v2005
    %2010 = vrot.lane.b32.xlu0 %v2009, 32
    %v2011 = vpop.permute.xlu0 %2010
    %vm2012 = vcmask 523520
    %s2013 = scalar_lea.vmem %s1, 208
    %2014 = vst.msk [vmem:[%s2013] sm:$0x3] %vm2012, %v2011
    %s2015 = scalar_lea.vmem %s1, 86
    %2016 = vst.msk [vmem:[%s2015] sm:$0xc] %vm2012, %v2011
    %s2017 = scalar_lea.vmem %s1, 22
    %2018 = vst.msk [vmem:[%s2017] sm:$0xf0] %vm2012, %v2011
    %s2019 = scalar_lea.vmem [#allocation0], 721
    %s2020 = smov 3
    %v2021 = vld [vmem:[%s2019] ss:$8 sm:%s2020]
    %s2022 = scalar_lea.vmem [#allocation0], 353
    %v2023 = vld [vmem:[%s2022] ss:$8 sm:$0x3c]
    %vm2024 = vcmask 1045506
    %v2025 = vsel %vm2024, %v2023, %v2021
    %s2026 = scalar_lea.vmem [#allocation0], 145
    %s2027 = smov 192
    %v2028 = vld [vmem:[%s2026] ss:$8 sm:%s2027]
    %vm2029 = vcmask 1047558
    %v2030 = vsel %vm2029, %v2028, %v2025
    %2031 = vrot.lane.b32.xlu0 %v2030, 32
    %v2032 = vpop.permute.xlu0 %2031
    %vm2033 = vcmask 523520
    %s2034 = scalar_lea.vmem %s1, 120
    %2035 = vst.msk [vmem:[%s2034] sm:$0x3] %vm2033, %v2032
    %s2036 = scalar_lea.vmem %s1, 56
    %2037 = vst.msk [vmem:[%s2036] sm:$0x3c] %vm2033, %v2032
    %s2038 = scalar_lea.vmem %s1, 24
    %2039 = vst.msk [vmem:[%s2038] sm:$0xc0] %vm2033, %v2032
    %s2040 = scalar_lea.vmem [#allocation0], 929
    %s2041 = smov 3
    %v2042 = vld [vmem:[%s2040] ss:$8 sm:%s2041]
    %s2043 = scalar_lea.vmem [#allocation0], 721
    %v2044 = vld [vmem:[%s2043] ss:$8 sm:$0x3c]
    %vm2045 = vcmask 1045506
    %v2046 = vsel %vm2045, %v2044, %v2042
    %s2047 = scalar_lea.vmem [#allocation0], 353
    %s2048 = smov 192
    %v2049 = vld [vmem:[%s2047] ss:$8 sm:%s2048]
    %vm2050 = vcmask 1047558
    %v2051 = vsel %vm2050, %v2049, %v2046
    %2052 = vrot.lane.b32.xlu0 %v2051, 32
    %v2053 = vpop.permute.xlu0 %2052
    %vm2054 = vcmask 523520
    %s2055 = scalar_lea.vmem %s1, 152
    %2056 = vst.msk [vmem:[%s2055] sm:$0x3] %vm2054, %v2053
    %s2057 = scalar_lea.vmem %s1, 120
    %2058 = vst.msk [vmem:[%s2057] sm:$0x3c] %vm2054, %v2053
    %s2059 = scalar_lea.vmem %s1, 56
    %2060 = vst.msk [vmem:[%s2059] sm:$0xc0] %vm2054, %v2053
    %s2061 = scalar_lea.vmem [#allocation0], 1137
    %s2062 = smov 3
    %v2063 = vld [vmem:[%s2061] ss:$8 sm:%s2062]
    %s2064 = scalar_lea.vmem [#allocation0], 929
    %v2065 = vld [vmem:[%s2064] ss:$8 sm:$0x3c]
    %vm2066 = vcmask 1045506
    %v2067 = vsel %vm2066, %v2065, %v2063
    %s2068 = scalar_lea.vmem [#allocation0], 721
    %s2069 = smov 192
    %v2070 = vld [vmem:[%s2068] ss:$8 sm:%s2069]
    %vm2071 = vcmask 1047558
    %v2072 = vsel %vm2071, %v2070, %v2067
    %2073 = vrot.lane.b32.xlu0 %v2072, 32
    %v2074 = vpop.permute.xlu0 %2073
    %vm2075 = vcmask 523520
    %s2076 = scalar_lea.vmem %s1, 184
    %2077 = vst.msk [vmem:[%s2076] sm:$0x3] %vm2075, %v2074
    %s2078 = scalar_lea.vmem %s1, 152
    %2079 = vst.msk [vmem:[%s2078] sm:$0x3c] %vm2075, %v2074
    %s2080 = scalar_lea.vmem %s1, 120
    %2081 = vst.msk [vmem:[%s2080] sm:$0xc0] %vm2075, %v2074
    %s2082 = scalar_lea.vmem [#allocation0], 977
    %s2083 = smov 3
    %v2084 = vld [vmem:[%s2082] ss:$8 sm:%s2083]
    %2085 = vrot.lane.b32.xlu0 %v2084, 32
    %v2086 = vpop.permute.xlu0 %2085
    %vm2087 = vcmask 523520
    %s2088 = scalar_lea.vmem %s1, 158
    %2089 = vst.msk [vmem:[%s2088] sm:$0x3] %vm2087, %v2086

// kernel: run_model.1
$region0: #{run_model.1}
  #allocation0 [shape = 'u32[]', space=smem, size = 0x4, offset = 0x4, fixed_abs, tag = 'smem constant byte address 0x4 - core index']
  #allocation1 [shape = 'u32[72,128]{1,0:T(1,128)}', space=vmem, size = 0x9000, scoped, tag = 'internal scratch']
  %s0 = inlined_call_operand.vmem [shape: f32[3,3,18,128], index: 0, kind: input, shape index: {}]
  %s1 = inlined_call_operand.vmem [shape: f32[32,128], index: 1, kind: input, shape index: {}]
  %s2 = inlined_call_operand.vmem [shape: f32[16,128], index: 2, kind: output, shape index: {}]
  %s3 = sld [smem:[#allocation0]]
  $region18: #{run_model.1} parent=0
    _
  %s5 = ssub.s32 1, %s3
  %s6 = scalar_select 0, %s5, %s3
  // Predicated region
  $region2: #{run_model.1} parent=0 // pred_check
    _
  $region3: #{run_model.1} parent=0 // pred_check_branch
    %8 = sbr.rel (0) target = $region5
  $region4: #{run_model.1} parent=0 // pred_region
    _
  $region5: #{run_model.1} parent=0 // pred_fallthru
    _
  // Predicated region
  $region6: #{run_model.1} parent=0 // pred_check
    _
  $region7: #{run_model.1} parent=0 // pred_check_branch
    %10 = sbr.rel (0) target = $region9
  $region8: #{run_model.1} parent=0 // pred_region
    _
  $region9: #{run_model.1} parent=0 // pred_fallthru
    _
  %v11 = vld [vmem:[%s0] sm:$0xff]
  %v12 = vld [vmem:[%s0 + $0x8] sm:$0xff]
  %v13 = vld [vmem:[%s0 + $0x10] sm:$0x3]
  %v14 = vld [vmem:[%s0 + $0x18] sm:$0xff]
  %v15 = vld [vmem:[%s0 + $0x20] sm:$0xff]
  %v16 = vld [vmem:[%s0 + $0x28] sm:$0x3]
  %v17 = vld [vmem:[%s0 + $0x30] sm:$0xff]
  %v18 = vld [vmem:[%s0 + $0x38] sm:$0xff]
  %v19 = vld [vmem:[%s0 + $0x40] sm:$0x3]
  %v20 = vld [vmem:[%s1] sm:$0xff]
  %v21 = vld [vmem:[%s1 + $0x8] sm:$0xff]
  %v22 = vld [vmem:[%s1 + $0x10] sm:$0xff]
  %v23 = vld [vmem:[%s1 + $0x18] sm:$0xff]
  %v24 = vadd.f32 %v11, %v12
  %vm25 = vcmask 1041408
  %v26 = vsel %vm25, %v13, 0.0
  %v27 = vadd.f32 %v24, %v26
  %v28 = vadd.f32 %v27, %v14
  %v29 = vadd.f32 %v28, %v15
  %v30 = vsel %vm25, %v16, 0.0
  %v31 = vadd.f32 %v29, %v30
  %v32 = vadd.f32 %v31, %v17
  %v33 = vadd.f32 %v32, %v18
  %v34 = vsel %vm25, %v19, 0.0
  %v35 = vadd.f32 %v33, %v34
  %36 = vadd.xlane.f32.xlu0 %v35
  %v37 = vpop.xlane.xlu0 %36
  %v38 = vrot.slane %v37, 4
  %v39 = vadd.f32 %v37, %v38
  %v40 = vrot.slane %v39, 2
  %v41 = vadd.f32 %v39, %v40
  %v42 = vrot.slane %v41, 1
  %v43 = vadd.f32 %v41, %v42
  %s44 = vtos %v43
  %s45 = smul.f32 %s44, 0.00016276042
  %v46 = vmul.f32 %v11, %v11
  %v47 = vmul.f32 %v12, %v12
  %v48 = vmul.f32 %v13, %v13
  %v49 = vmul.f32 %v14, %v14
  %v50 = vmul.f32 %v15, %v15
  %v51 = vmul.f32 %v16, %v16
  %v52 = vmul.f32 %v17, %v17
  %v53 = vmul.f32 %v18, %v18
  %v54 = vmul.f32 %v19, %v19
  %v55 = vadd.f32 %v46, %v47
  %v56 = vsel %vm25, %v48, 0.0
  %v57 = vadd.f32 %v55, %v56
  %v58 = vadd.f32 %v57, %v49
  %v59 = vadd.f32 %v58, %v50
  %v60 = vsel %vm25, %v51, 0.0
  %v61 = vadd.f32 %v59, %v60
  %v62 = vadd.f32 %v61, %v52
  %v63 = vadd.f32 %v62, %v53
  %v64 = vsel %vm25, %v54, 0.0
  %v65 = vadd.f32 %v63, %v64
  %66 = vadd.xlane.f32.xlu0 %v65
  %v67 = vpop.xlane.xlu0 %66
  %v68 = vrot.slane %v67, 4
  %v69 = vadd.f32 %v67, %v68
  %v70 = vrot.slane %v69, 2
  %v71 = vadd.f32 %v69, %v70
  %v72 = vrot.slane %v71, 1
  %v73 = vadd.f32 %v71, %v72
  %s74 = vtos %v73
  %s75 = smul.f32 %s74, 0.00016276042
  %s76 = smul.f32 %s45, %s45
  %s77 = ssub.f32 %s75, %s76
  %s78 = sadd.f32 %s77, 1e-05
  %v79 = vstv %s78
  %v80 = vrsqrt.pop %v79
  %v81 = vmul.f32 %v80, %v79
  %v82 = vmul.f32 %v81, %v80
  %v83 = vmul.f32 0.5, %v82
  %v84 = vsub.f32 1.5, %v83
  %v85 = vmul.f32 %v80, %v84
  %vm86 = vweird.f32 %v79
  %vm87 = vweird.f32 %v80
  %vm88 = vmor %vm86, %vm87
  %v89 = vsel %vm88, %v80, %v85
  %v90 = vperm.slane %v20, 0
  %v91 = vmul.f32 %v90, %v11
  %v92 = vmul.f32 %v90, %v12
  %v93 = vadd.f32 %v91, 0.0
  %v94 = vadd.f32 %v92, 0.0
  %v95 = vperm.slane %v20, 3
  %v96 = vmul.f32 %v95, %v11
  %v97 = vmul.f32 %v95, %v12
  %v98 = vmul.f32 %v95, %v13
  %vm102 = vcmask 1046528
  %v103 = vrot.slane %v96, 1
  %v104 = vrot.slane %v97, 1
  %v105 = vsel %vm102, %v103, %v104
  %v106 = vrot.slane %v98, 1
  %v107 = vsel %vm102, %v104, %v106
  %v110 = vadd.f32 %v93, %v105
  %v111 = vadd.f32 %v94, %v107
  %v112 = vperm.slane %v20, 6
  %v113 = vmul.f32 %v112, %v11
  %v114 = vmul.f32 %v112, %v12
  %v115 = vmul.f32 %v112, %v13
  %vm119 = vcmask 1045504
  %v120 = vrot.slane %v113, 2
  %v121 = vrot.slane %v114, 2
  %v122 = vsel %vm119, %v120, %v121
  %v123 = vrot.slane %v115, 2
  %v124 = vsel %vm119, %v121, %v123
  %v127 = vadd.f32 %v110, %v122
  %v128 = vadd.f32 %v111, %v124
  %s129 = scalar_lea.vmem %s0, 72
  %v130 = vld [vmem:[%s129] sm:$0xff]
  %v131 = vld [vmem:[%s129 + $0x8] sm:$0xff]
  %v132 = vld [vmem:[%s129 + $0x10] sm:$0x3]
  %v133 = vperm.slane %v20, 1
  %v134 = vmul.f32 %v133, %v130
  %v135 = vmul.f32 %v133, %v131
  %v136 = vadd.f32 %v127, %v134
  %v137 = vadd.f32 %v128, %v135
  %v138 = vperm.slane %v20, 4
  %v139 = vmul.f32 %v138, %v130
  %v140 = vmul.f32 %v138, %v131
  %v141 = vmul.f32 %v138, %v132
  %v145 = vrot.slane %v139, 1
  %v146 = vrot.slane %v140, 1
  %v147 = vsel %vm102, %v145, %v146
  %v148 = vrot.slane %v141, 1
  %v149 = vsel %vm102, %v146, %v148
  %v152 = vadd.f32 %v136, %v147
  %v153 = vadd.f32 %v137, %v149
  %v154 = vperm.slane %v20, 7
  %v155 = vmul.f32 %v154, %v130
  %v156 = vmul.f32 %v154, %v131
  %v157 = vmul.f32 %v154, %v132
  %v161 = vrot.slane %v155, 2
  %v162 = vrot.slane %v156, 2
  %v163 = vsel %vm119, %v161, %v162
  %v164 = vrot.slane %v157, 2
  %v165 = vsel %vm119, %v162, %v164
  %v168 = vadd.f32 %v152, %v163
  %v169 = vadd.f32 %v153, %v165
  %s170 = scalar_lea.vmem %s0, 144
  %v171 = vld [vmem:[%s170] sm:$0xff]
  %v172 = vld [vmem:[%s170 + $0x8] sm:$0xff]
  %v173 = vld [vmem:[%s170 + $0x10] sm:$0x3]
  %v174 = vperm.slane %v20, 2
  %v175 = vmul.f32 %v174, %v171
  %v176 = vmul.f32 %v174, %v172
  %v177 = vadd.f32 %v168, %v175
  %v178 = vadd.f32 %v169, %v176
  %v179 = vperm.slane %v20, 5
  %v180 = vmul.f32 %v179, %v171
  %v181 = vmul.f32 %v179, %v172
  %v182 = vmul.f32 %v179, %v173
  %v186 = vrot.slane %v180, 1
  %v187 = vrot.slane %v181, 1
  %v188 = vsel %vm102, %v186, %v187
  %v189 = vrot.slane %v182, 1
  %v190 = vsel %vm102, %v187, %v189
  %v193 = vadd.f32 %v177, %v188
  %v194 = vadd.f32 %v178, %v190
  %v195 = vperm.slane %v21, 0
  %v196 = vmul.f32 %v195, %v171
  %v197 = vmul.f32 %v195, %v172
  %v198 = vmul.f32 %v195, %v173
  %v202 = vrot.slane %v196, 2
  %v203 = vrot.slane %v197, 2
  %v204 = vsel %vm119, %v202, %v203
  %v205 = vrot.slane %v198, 2
  %v206 = vsel %vm119, %v203, %v205
  %v209 = vadd.f32 %v193, %v204
  %v210 = vadd.f32 %v194, %v206
  %v211 = vperm.slane %v21, 1
  %v212 = vmul.f32 %v211, %v14
  %v213 = vmul.f32 %v211, %v15
  %v214 = vadd.f32 %v209, %v212
  %v215 = vadd.f32 %v210, %v213
  %v216 = vperm.slane %v21, 4
  %v217 = vmul.f32 %v216, %v14
  %v218 = vmul.f32 %v216, %v15
  %v219 = vmul.f32 %v216, %v16
  %v223 = vrot.slane %v217, 1
  %v224 = vrot.slane %v218, 1
  %v225 = vsel %vm102, %v223, %v224
  %v226 = vrot.slane %v219, 1
  %v227 = vsel %vm102, %v224, %v226
  %v230 = vadd.f32 %v214, %v225
  %v231 = vadd.f32 %v215, %v227
  %v232 = vperm.slane %v21, 7
  %v233 = vmul.f32 %v232, %v14
  %v234 = vmul.f32 %v232, %v15
  %v235 = vmul.f32 %v232, %v16
  %v239 = vrot.slane %v233, 2
  %v240 = vrot.slane %v234, 2
  %v241 = vsel %vm119, %v239, %v240
  %v242 = vrot.slane %v235, 2
  %v243 = vsel %vm119, %v240, %v242
  %v246 = vadd.f32 %v230, %v241
  %v247 = vadd.f32 %v231, %v243
  %s248 = scalar_lea.vmem %s0, 96
  %v249 = vld [vmem:[%s248] sm:$0xff]
  %v250 = vld [vmem:[%s248 + $0x8] sm:$0xff]
  %v251 = vld [vmem:[%s248 + $0x10] sm:$0x3]
  %v252 = vperm.slane %v21, 2
  %v253 = vmul.f32 %v252, %v249
  %v254 = vmul.f32 %v252, %v250
  %v255 = vadd.f32 %v246, %v253
  %v256 = vadd.f32 %v247, %v254
  %v257 = vperm.slane %v21, 5
  %v258 = vmul.f32 %v257, %v249
  %v259 = vmul.f32 %v257, %v250
  %v260 = vmul.f32 %v257, %v251
  %v264 = vrot.slane %v258, 1
  %v265 = vrot.slane %v259, 1
  %v266 = vsel %vm102, %v264, %v265
  %v267 = vrot.slane %v260, 1
  %v268 = vsel %vm102, %v265, %v267
  %v271 = vadd.f32 %v255, %v266
  %v272 = vadd.f32 %v256, %v268
  %v273 = vperm.slane %v22, 0
  %v274 = vmul.f32 %v273, %v249
  %v275 = vmul.f32 %v273, %v250
  %v276 = vmul.f32 %v273, %v251
  %v280 = vrot.slane %v274, 2
  %v281 = vrot.slane %v275, 2
  %v282 = vsel %vm119, %v280, %v281
  %v283 = vrot.slane %v276, 2
  %v284 = vsel %vm119, %v281, %v283
  %v287 = vadd.f32 %v271, %v282
  %v288 = vadd.f32 %v272, %v284
  %s289 = scalar_lea.vmem %s0, 168
  %v290 = vld [vmem:[%s289] sm:$0xff]
  %v291 = vld [vmem:[%s289 + $0x8] sm:$0xff]
  %v292 = vld [vmem:[%s289 + $0x10] sm:$0x3]
  %v293 = vperm.slane %v21, 3
  %v294 = vmul.f32 %v293, %v290
  %v295 = vmul.f32 %v293, %v291
  %v296 = vadd.f32 %v287, %v294
  %v297 = vadd.f32 %v288, %v295
  %v298 = vperm.slane %v21, 6
  %v299 = vmul.f32 %v298, %v290
  %v300 = vmul.f32 %v298, %v291
  %v301 = vmul.f32 %v298, %v292
  %v305 = vrot.slane %v299, 1
  %v306 = vrot.slane %v300, 1
  %v307 = vsel %vm102, %v305, %v306
  %v308 = vrot.slane %v301, 1
  %v309 = vsel %vm102, %v306, %v308
  %v312 = vadd.f32 %v296, %v307
  %v313 = vadd.f32 %v297, %v309
  %v314 = vperm.slane %v22, 1
  %v315 = vmul.f32 %v314, %v290
  %v316 = vmul.f32 %v314, %v291
  %v317 = vmul.f32 %v314, %v292
  %v321 = vrot.slane %v315, 2
  %v322 = vrot.slane %v316, 2
  %v323 = vsel %vm119, %v321, %v322
  %v324 = vrot.slane %v317, 2
  %v325 = vsel %vm119, %v322, %v324
  %v328 = vadd.f32 %v312, %v323
  %v329 = vadd.f32 %v313, %v325
  %v330 = vperm.slane %v22, 2
  %v331 = vmul.f32 %v330, %v17
  %v332 = vmul.f32 %v330, %v18
  %v333 = vadd.f32 %v328, %v331
  %v334 = vadd.f32 %v329, %v332
  %v335 = vperm.slane %v22, 5
  %v336 = vmul.f32 %v335, %v17
  %v337 = vmul.f32 %v335, %v18
  %v338 = vmul.f32 %v335, %v19
  %v342 = vrot.slane %v336, 1
  %v343 = vrot.slane %v337, 1
  %v344 = vsel %vm102, %v342, %v343
  %v345 = vrot.slane %v338, 1
  %v346 = vsel %vm102, %v343, %v345
  %v349 = vadd.f32 %v333, %v344
  %v350 = vadd.f32 %v334, %v346
  %v351 = vperm.slane %v23, 0
  %v352 = vmul.f32 %v351, %v17
  %v353 = vmul.f32 %v351, %v18
  %v354 = vmul.f32 %v351, %v19
  %v358 = vrot.slane %v352, 2
  %v359 = vrot.slane %v353, 2
  %v360 = vsel %vm119, %v358, %v359
  %v361 = vrot.slane %v354, 2
  %v362 = vsel %vm119, %v359, %v361
  %v365 = vadd.f32 %v349, %v360
  %v366 = vadd.f32 %v350, %v362
  %s367 = scalar_lea.vmem %s0, 120
  %v368 = vld [vmem:[%s367] sm:$0xff]
  %v369 = vld [vmem:[%s367 + $0x8] sm:$0xff]
  %v370 = vld [vmem:[%s367 + $0x10] sm:$0x3]
  %v371 = vperm.slane %v22, 3
  %v372 = vmul.f32 %v371, %v368
  %v373 = vmul.f32 %v371, %v369
  %v374 = vadd.f32 %v365, %v372
  %v375 = vadd.f32 %v366, %v373
  %v376 = vperm.slane %v22, 6
  %v377 = vmul.f32 %v376, %v368
  %v378 = vmul.f32 %v376, %v369
  %v379 = vmul.f32 %v376, %v370
  %v383 = vrot.slane %v377, 1
  %v384 = vrot.slane %v378, 1
  %v385 = vsel %vm102, %v383, %v384
  %v386 = vrot.slane %v379, 1
  %v387 = vsel %vm102, %v384, %v386
  %v390 = vadd.f32 %v374, %v385
  %v391 = vadd.f32 %v375, %v387
  %v392 = vperm.slane %v23, 1
  %v393 = vmul.f32 %v392, %v368
  %v394 = vmul.f32 %v392, %v369
  %v395 = vmul.f32 %v392, %v370
  %v399 = vrot.slane %v393, 2
  %v400 = vrot.slane %v394, 2
  %v401 = vsel %vm119, %v399, %v400
  %v402 = vrot.slane %v395, 2
  %v403 = vsel %vm119, %v400, %v402
  %v406 = vadd.f32 %v390, %v401
  %v407 = vadd.f32 %v391, %v403
  %s408 = scalar_lea.vmem %s0, 192
  %v409 = vld [vmem:[%s408] sm:$0xff]
  %v410 = vld [vmem:[%s408 + $0x8] sm:$0xff]
  %v411 = vld [vmem:[%s408 + $0x10] sm:$0x3]
  %v412 = vperm.slane %v22, 4
  %v413 = vmul.f32 %v412, %v409
  %v414 = vmul.f32 %v412, %v410
  %v415 = vadd.f32 %v406, %v413
  %v416 = vadd.f32 %v407, %v414
  %v417 = vperm.slane %v22, 7
  %v418 = vmul.f32 %v417, %v409
  %v419 = vmul.f32 %v417, %v410
  %v420 = vmul.f32 %v417, %v411
  %v424 = vrot.slane %v418, 1
  %v425 = vrot.slane %v419, 1
  %v426 = vsel %vm102, %v424, %v425
  %v427 = vrot.slane %v420, 1
  %v428 = vsel %vm102, %v425, %v427
  %v431 = vadd.f32 %v415, %v426
  %v432 = vadd.f32 %v416, %v428
  %v433 = vperm.slane %v23, 2
  %v434 = vmul.f32 %v433, %v409
  %v435 = vmul.f32 %v433, %v410
  %v436 = vmul.f32 %v433, %v411
  %v440 = vrot.slane %v434, 2
  %v441 = vrot.slane %v435, 2
  %v442 = vsel %vm119, %v440, %v441
  %v443 = vrot.slane %v436, 2
  %v444 = vsel %vm119, %v441, %v443
  %v447 = vadd.f32 %v431, %v442
  %v448 = vadd.f32 %v432, %v444
  %v449 = vmul.f32 %v447, %v89
  %v450 = vmul.f32 %v448, %v89
  %v451 = vstv %s45
  %v452 = vmul.f32 %v451, %v89
  %v453 = vmul.f32 %v452, %v23
  %v455 = vrot.slane %v453, 1
  %v457 = vsub.f32 %v23, %v455
  %v458 = vperm.slane %v457, 3
  %v459 = vadd.f32 %v449, %v458
  %v460 = vadd.f32 %v450, %v458
  %v461 = vlaneseq
  %v462 = vshrl.u32 %v461, 7
  %v463 = vadd.s32 %v462, 8
  %v464 = vlaneseq
  %v465 = vand.u32 %v464, 127
  %vm466 = vcmp.lt.s32.totalorder %v462, 14
  %vm467 = vcmp.lt.s32.totalorder %v463, 14
  %vm468 = vcmp.lt.s32.totalorder %v465, 96
  %vm469 = vmand %vm466, %vm468
  %vm470 = vmand %vm467, %vm468
  %v471 = vand.u32 %v465, 15
  %vm472 = vcmp.lt.s32.totalorder %v471, 14
  %vm473 = vmand %vm469, %vm472
  %vm474 = vmand %vm470, %vm472
  %v475 = vsel %vm473, %v459, 0.0
  %v476 = vsel %vm474, %v460, 0.0
  %v477 = vadd.f32 %v475, %v476
  %478 = vadd.xlane.f32.xlu0 %v477
  %v479 = vpop.xlane.xlu0 %478
  %v480 = vrot.slane %v479, 4
  %v481 = vadd.f32 %v479, %v480
  %v482 = vrot.slane %v481, 2
  %v483 = vadd.f32 %v481, %v482
  %v484 = vrot.slane %v483, 1
  %v485 = vadd.f32 %v483, %v484
  %s486 = vtos %v485
  %s487 = smul.f32 %s486, 0.0008503401
  %v488 = vmul.f32 %v475, %v475
  %v489 = vmul.f32 %v476, %v476
  %v490 = vadd.f32 %v488, %v489
  %491 = vadd.xlane.f32.xlu0 %v490
  %v492 = vpop.xlane.xlu0 %491
  %v493 = vrot.slane %v492, 4
  %v494 = vadd.f32 %v492, %v493
  %v495 = vrot.slane %v494, 2
  %v496 = vadd.f32 %v494, %v495
  %v497 = vrot.slane %v496, 1
  %v498 = vadd.f32 %v496, %v497
  %s499 = vtos %v498
  %s500 = smul.f32 %s499, 0.0008503401
  %s501 = smul.f32 %s487, %s487
  %s502 = ssub.f32 %s500, %s501
  %s503 = sadd.f32 %s502, 1e-05
  %v504 = vstv %s503
  %v505 = vrsqrt.pop %v504
  %v506 = vmul.f32 %v505, %v504
  %v507 = vmul.f32 %v506, %v505
  %v508 = vmul.f32 0.5, %v507
  %v509 = vsub.f32 1.5, %v508
  %v510 = vmul.f32 %v505, %v509
  %vm511 = vweird.f32 %v504
  %vm512 = vweird.f32 %v505
  %vm513 = vmor %vm511, %vm512
  %v514 = vsel %vm513, %v505, %v510
  %v515 = vstv %s487
  %v516 = vsub.f32 %v459, %v515
  %v517 = vsub.f32 %v460, %v515
  %v518 = vmul.f32 %v516, %v514
  %v519 = vmul.f32 %v517, %v514
  %520 = vst [vmem:[%s2] sm:$0xff] %v518
  %521 = vst [vmem:[%s2 + $0x8] sm:$0xff] %v519
  // Predicated region
  $region10: #{run_model.1} parent=0 // pred_check
    _
  $region11: #{run_model.1} parent=0 // pred_check_branch
    %523 = sbr.rel (0) target = $region13
  $region12: #{run_model.1} parent=0 // pred_region
    _
  $region13: #{run_model.1} parent=0 // pred_fallthru
    _
  // Predicated region
  $region14: #{run_model.1} parent=0 // pred_check
    _
  $region15: #{run_model.1} parent=0 // pred_check_branch
    %525 = sbr.rel (0) target = $region17
  $region16: #{run_model.1} parent=0 // pred_region
    _
  $region17: #{run_model.1} parent=0 // pred_fallthru
    _

</llo_original>
